<compile_context>
chip_gen: v6e
topology: v6e:2x2x1
jax: 0.10.0
libtpu: 0.0.40
codegen_flags: <defaults>
</compile_context>

<pallas_src>
import jax
import jax.numpy as jnp
from jax.experimental import pallas as pl
from jax.experimental.pallas import tpu as pltpu

EPS = 1e-3


def _fused_kernel(x_ref, s_ref, w_ref, gamma_ref, beta_ref, o_ref):
    # x_ref    : (Cin, M)    f32   channels-major pixels, M = H*W
    # s_ref    : (1, Cin)    f32   pre-sigmoid per-channel gate
    # w_ref    : (Cout, Cin) f32   1x1 conv weight
    # gamma_ref: (Cout, 1)   f32   BN scale
    # beta_ref : (Cout, 1)   f32   BN shift
    # o_ref    : (Cout, M)   f32
    m = o_ref.shape[1]
    inv_m = 1.0 / float(m)

    # Fold the sigmoid gate into the small weight instead of the activation:
    #   conv(gate * x) == (W * gate) @ x     (1x1 conv is linear in x).
    # Multiply in f32, cast once to bf16 (single rounding).
    gate = jax.nn.sigmoid(s_ref[...])                            # (1, Cin) f32
    w_eff = (w_ref[...] * gate).astype(jnp.bfloat16)             # (Cout, Cin) bf16

    # In-kernel cast of the large activation (cheap VPU op, no extra HBM pass).
    x_bf = x_ref[...].astype(jnp.bfloat16)                       # (Cin, M) bf16

    # 1x1 convolution == matmul on the MXU, f32 accumulation.
    y = jnp.dot(w_eff, x_bf,
                preferred_element_type=jnp.float32)              # (Cout, M) f32

    # BatchNorm over the M pixels (biased batch statistics), one pass:
    # two independent reductions, no (Cout, M) centered temporary.
    s_sum = jnp.sum(y, axis=1, keepdims=True)                    # (Cout, 1)
    s_sq = jnp.sum(y * y, axis=1, keepdims=True)                 # (Cout, 1)
    mean = s_sum * inv_m
    var = s_sq * inv_m - mean * mean
    scale = jax.lax.rsqrt(var + EPS) * gamma_ref[...]            # (Cout, 1)
    shift = beta_ref[...] - mean * scale                         # (Cout, 1)
    o_ref[...] = y * scale + shift                               # (Cout, M)


def fused_sigmoid_mul_conv_bn(x_nchw, s_nc11, w_oi11, gamma, beta):
    """x_nchw: (N, Cin, H, W), s_nc11: (N, Cin, 1, 1), w_oi11: (Cout, Cin, 1, 1),
    gamma/beta: (Cout,). Returns (N, Cout, H, W) f32."""
    N, Cin, H, W = x_nchw.shape
    Cout = w_oi11.shape[0]
    assert N == 1, "kernel assumes N == 1 (per-sample gate + single-sample BN)"
    M = H * W

    # Native-layout views: pure reshapes, zero transposes, zero dtype casts
    # (all casting happens inside the kernel).
    x2d = x_nchw.reshape(Cin, M).astype(jnp.float32)        # (Cin, M)
    s2d = s_nc11.reshape(1, Cin).astype(jnp.float32)        # (1, Cin)
    w2d = w_oi11.reshape(Cout, Cin).astype(jnp.float32)     # (Cout, Cin)
    g2d = gamma.reshape(Cout, 1).astype(jnp.float32)        # (Cout, 1)
    b2d = beta.reshape(Cout, 1).astype(jnp.float32)         # (Cout, 1)

    bytes_accessed = 4 * (Cin * M + Cin + Cout * Cin + 2 * Cout + Cout * M)
    cost = pl.CostEstimate(
        flops=2 * Cout * Cin * M + 6 * Cout * M,   # matmul + BN elementwise
        transcendentals=Cin + Cout,                # sigmoid + rsqrt
        bytes_accessed=bytes_accessed,
    )

    vmem = pl.BlockSpec(memory_space=pltpu.MemorySpace.VMEM)
    out2d = pl.pallas_call(
        _fused_kernel,
        out_shape=jax.ShapeDtypeStruct((Cout, M), jnp.float32),
        in_specs=[vmem, vmem, vmem, vmem, vmem],
        out_specs=vmem,
        cost_estimate=cost,
        compiler_params=pltpu.CompilerParams(),
    )(x2d, s2d, w2d, g2d, b2d)

    # (Cout, M) -> (N, Cout, H, W): again a free reshape, no transpose.
    return out2d.reshape(N, Cout, H, W)


def _reference(x_nchw, s_nc11, w_oi11, gamma, beta):
    # Full-f32 reference matching the PyTorch module's forward (training-mode BN).
    gate = jax.nn.sigmoid(s_nc11)
    xg = gate * x_nchw
    y = jax.lax.conv_general_dilated(
        xg, w_oi11, window_strides=(1, 1), padding="VALID",
        dimension_numbers=("NCHW", "OIHW", "NCHW"))
    mean = jnp.mean(y, axis=(0, 2, 3), keepdims=True)
    var = jnp.mean((y - mean) ** 2, axis=(0, 2, 3), keepdims=True)
    return (y - mean) * jax.lax.rsqrt(var + EPS) * gamma.reshape(1, -1, 1, 1) \
        + beta.reshape(1, -1, 1, 1)


if __name__ == "__main__":
    key = jax.random.PRNGKey(0)
    k1, k2, k3, k4, k5 = jax.random.split(key, 5)

    N, Cin, Cout, H, W = 1, 640, 160, 14, 14
    x152 = jax.random.normal(k1, (N, Cin, H, W), dtype=jnp.float32)
    x156 = jax.random.normal(k2, (N, Cin, 1, 1), dtype=jnp.float32)
    # deterministic synthetic parameters (conv weight, BN affine)
    conv_w = jax.random.normal(k3, (Cout, Cin, 1, 1), dtype=jnp.float32) * 0.05
    gamma = 1.0 + 0.1 * jax.random.normal(k4, (Cout,), dtype=jnp.float32)
    beta = 0.1 * jax.random.normal(k5, (Cout,), dtype=jnp.float32)

    fused = jax.jit(fused_sigmoid_mul_conv_bn)
    out = jax.block_until_ready(fused(x152, x156, conv_w, gamma, beta))
    ref = jax.block_until_ready(_reference(x152, x156, conv_w, gamma, beta))

    assert out.shape == (N, Cout, H, W)
    # bf16 MXU operands (f32 accumulation, f32 BN) -> bf16-level tolerance
    # against the full-f32 reference.
    assert jnp.allclose(out, ref, atol=5e-2, rtol=5e-2), "mismatch vs reference"
    print("KERNEL_OK")
</pallas_src>

<mosaic_0001>
module attributes {stable_mosaic.version = 11 : i64} {
  func.func @_fused_kernel(%arg0: memref<640x196xf32, #tpu.memory_space<vmem>>, %arg1: memref<1x640xf32, #tpu.memory_space<vmem>>, %arg2: memref<160x640xf32, #tpu.memory_space<vmem>>, %arg3: memref<160x1xf32, #tpu.memory_space<vmem>>, %arg4: memref<160x1xf32, #tpu.memory_space<vmem>>, %arg5: memref<160x196xf32, #tpu.memory_space<vmem>>) attributes {dimension_semantics = [], scalar_prefetch = 0 : i64, scratch_operands = 0 : i64, tpu.core_type = #tpu.core_type<tc>} {
    %c0 = arith.constant 0 : index
    %c0_0 = arith.constant 0 : index
    %0 = vector.load %arg1[%c0, %c0_0] : memref<1x640xf32, #tpu.memory_space<vmem>>, vector<1x640xf32>
    %1 = arith.negf %0 : vector<1x640xf32>
    %2 = math.exp %1 : vector<1x640xf32>
    %cst = arith.constant 1.000000e+00 : f32
    %3 = vector.broadcast %cst : f32 to vector<1x640xf32>
    %4 = arith.addf %3, %2 : vector<1x640xf32>
    %5 = arith.divf %3, %4 : vector<1x640xf32>
    %c0_1 = arith.constant 0 : index
    %c0_2 = arith.constant 0 : index
    %6 = vector.load %arg2[%c0_1, %c0_2] : memref<160x640xf32, #tpu.memory_space<vmem>>, vector<160x640xf32>
    %7 = vector.broadcast %5 : vector<1x640xf32> to vector<160x640xf32>
    %8 = arith.mulf %6, %7 : vector<160x640xf32>
    %9 = arith.truncf %8 : vector<160x640xf32> to vector<160x640xbf16>
    %c0_3 = arith.constant 0 : index
    %c0_4 = arith.constant 0 : index
    %10 = vector.load %arg0[%c0_3, %c0_4] : memref<640x196xf32, #tpu.memory_space<vmem>>, vector<640x196xf32>
    %11 = arith.truncf %10 : vector<640x196xf32> to vector<640x196xbf16>
    %cst_5 = arith.constant dense<0.000000e+00> : vector<160x196xf32>
    %12 = tpu.matmul %9, %11, %cst_5 {dimension_numbers = #tpu.dot_dimension_numbers<[1], [0], [0], [1], [0, 0, 1, 1], [], []>} : vector<160x640xbf16>, vector<640x196xbf16>, vector<160x196xf32> -> vector<160x196xf32>
    %cst_6 = arith.constant dense<0.000000e+00> : vector<160xf32>
    %13 = vector.multi_reduction <add>, %12, %cst_6 [1] : vector<160x196xf32> to vector<160xf32>
    %14 = vector.shape_cast %13 : vector<160xf32> to vector<160x1xf32>
    %15 = arith.mulf %12, %12 : vector<160x196xf32>
    %cst_7 = arith.constant dense<0.000000e+00> : vector<160xf32>
    %16 = vector.multi_reduction <add>, %15, %cst_7 [1] : vector<160x196xf32> to vector<160xf32>
    %17 = vector.shape_cast %16 : vector<160xf32> to vector<160x1xf32>
    %cst_8 = arith.constant 0.00510204071 : f32
    %18 = vector.broadcast %cst_8 : f32 to vector<160x1xf32>
    %19 = arith.mulf %14, %18 : vector<160x1xf32>
    %cst_9 = arith.constant 0.00510204071 : f32
    %20 = vector.broadcast %cst_9 : f32 to vector<160x1xf32>
    %21 = arith.mulf %17, %20 : vector<160x1xf32>
    %22 = arith.mulf %19, %19 : vector<160x1xf32>
    %23 = arith.subf %21, %22 : vector<160x1xf32>
    %cst_10 = arith.constant 1.000000e-03 : f32
    %24 = vector.broadcast %cst_10 : f32 to vector<160x1xf32>
    %25 = arith.addf %23, %24 : vector<160x1xf32>
    %26 = math.rsqrt %25 : vector<160x1xf32>
    %c0_11 = arith.constant 0 : index
    %c0_12 = arith.constant 0 : index
    %27 = vector.load %arg3[%c0_11, %c0_12] : memref<160x1xf32, #tpu.memory_space<vmem>>, vector<160x1xf32>
    %28 = arith.mulf %26, %27 : vector<160x1xf32>
    %c0_13 = arith.constant 0 : index
    %c0_14 = arith.constant 0 : index
    %29 = vector.load %arg4[%c0_13, %c0_14] : memref<160x1xf32, #tpu.memory_space<vmem>>, vector<160x1xf32>
    %30 = arith.mulf %19, %28 : vector<160x1xf32>
    %31 = arith.subf %29, %30 : vector<160x1xf32>
    %32 = vector.broadcast %28 : vector<160x1xf32> to vector<160x196xf32>
    %33 = arith.mulf %12, %32 : vector<160x196xf32>
    %34 = vector.broadcast %31 : vector<160x1xf32> to vector<160x196xf32>
    %35 = arith.addf %33, %34 : vector<160x196xf32>
    %c0_15 = arith.constant 0 : index
    %c0_16 = arith.constant 0 : index
    %36 = vector.load %arg5[%c0_15, %c0_16] : memref<160x196xf32, #tpu.memory_space<vmem>>, vector<160x196xf32>
    tpu.vector_store %arg5[%c0_15, %c0_16], %35 {strides = array<i32>} : memref<160x196xf32, #tpu.memory_space<vmem>>, vector<160x196xf32>,
    return
  }
}

</mosaic_0001>

<llo_original>
// kernel: fused_sigmoid_mul_conv_bn.1
$region0: #{fused_sigmoid_mul_conv_bn.1}
  #allocation0 [shape = 'u32[]', space=smem, size = 0x4, offset = 0x4, fixed_abs, tag = 'smem constant byte address 0x4 - core index']
  #allocation1 [shape = 'u32[144,128]{1,0:T(1,128)}', space=vmem, size = 0x12000, scoped, tag = 'internal scratch']
  %s0 = inlined_call_operand.vmem [shape: f32[640,196], index: 0, kind: input, shape index: {}]
  %s1 = inlined_call_operand.vmem [shape: f32[1,640], index: 1, kind: input, shape index: {}]
  %s2 = inlined_call_operand.vmem [shape: f32[160,640], index: 2, kind: input, shape index: {}]
  %s3 = inlined_call_operand.vmem [shape: f32[160,1], index: 3, kind: input, shape index: {}]
  %s4 = inlined_call_operand.vmem [shape: f32[160,1], index: 4, kind: input, shape index: {}]
  %s5 = inlined_call_operand.vmem [shape: f32[160,196], index: 5, kind: output, shape index: {}]
  %s6 = sld [smem:[#allocation0]]
  $region30: #{fused_sigmoid_mul_conv_bn.1} parent=0
    _
  %s8 = ssub.s32 1, %s6
  %s9 = scalar_select 0, %s8, %s6
  // Predicated region
  $region2: #{fused_sigmoid_mul_conv_bn.1} parent=0 // pred_check
    _
  $region3: #{fused_sigmoid_mul_conv_bn.1} parent=0 // pred_check_branch
    %11 = sbr.rel (0) target = $region5
  $region4: #{fused_sigmoid_mul_conv_bn.1} parent=0 // pred_region
    _
  $region5: #{fused_sigmoid_mul_conv_bn.1} parent=0 // pred_fallthru
    _
  // Predicated region
  $region6: #{fused_sigmoid_mul_conv_bn.1} parent=0 // pred_check
    _
  $region7: #{fused_sigmoid_mul_conv_bn.1} parent=0 // pred_check_branch
    %13 = sbr.rel (0) target = $region9
  $region8: #{fused_sigmoid_mul_conv_bn.1} parent=0 // pred_region
    _
  $region9: #{fused_sigmoid_mul_conv_bn.1} parent=0 // pred_fallthru
    _
  // Predicated region
  $region10: #{fused_sigmoid_mul_conv_bn.1} parent=0 // pred_check
    _
  $region11: #{fused_sigmoid_mul_conv_bn.1} parent=0 // pred_check_branch
    %15 = sbr.rel (0) target = $region13
  $region12: #{fused_sigmoid_mul_conv_bn.1} parent=0 // pred_region
    _
  $region13: #{fused_sigmoid_mul_conv_bn.1} parent=0 // pred_fallthru
    _
  // Predicated region
  $region14: #{fused_sigmoid_mul_conv_bn.1} parent=0 // pred_check
    _
  $region15: #{fused_sigmoid_mul_conv_bn.1} parent=0 // pred_check_branch
    %17 = sbr.rel (0) target = $region17
  $region16: #{fused_sigmoid_mul_conv_bn.1} parent=0 // pred_region
    _
  $region17: #{fused_sigmoid_mul_conv_bn.1} parent=0 // pred_fallthru
    _
  // Predicated region
  $region18: #{fused_sigmoid_mul_conv_bn.1} parent=0 // pred_check
    _
  $region19: #{fused_sigmoid_mul_conv_bn.1} parent=0 // pred_check_branch
    %19 = sbr.rel (0) target = $region21
  $region20: #{fused_sigmoid_mul_conv_bn.1} parent=0 // pred_region
    _
  $region21: #{fused_sigmoid_mul_conv_bn.1} parent=0 // pred_fallthru
    _
  %v21 = vld [vmem:[%s1] sm:$0x1f]
  %v22 = vxor.u32 %v21, 2147483648
  %v23 = vmul.f32 %v22, 1.442695
  %v24 = vpow.pop %v23
  %v25 = vadd.f32 %v24, 1.0
  %v26 = vrcp.pop %v25
  %v27 = vmul.f32 1.0, %v26
  %v28 = vld [vmem:[%s2] sm:$0xff]
  %v29 = vld [vmem:[%s2 + $0x8] sm:$0xff]
  %v30 = vld [vmem:[%s2 + $0x10] sm:$0xff]
  %v31 = vld [vmem:[%s2 + $0x18] sm:$0xff]
  %v32 = vld [vmem:[%s2 + $0x20] sm:$0xff]
  %v33 = vld [vmem:[%s2 + $0x28] sm:$0xff]
  %v34 = vld [vmem:[%s2 + $0x30] sm:$0xff]
  %v35 = vld [vmem:[%s2 + $0x38] sm:$0xff]
  %v36 = vld [vmem:[%s2 + $0x40] sm:$0xff]
  %v37 = vld [vmem:[%s2 + $0x48] sm:$0xff]
  %v38 = vld [vmem:[%s2 + $0x50] sm:$0xff]
  %v39 = vld [vmem:[%s2 + $0x58] sm:$0xff]
  %v40 = vld [vmem:[%s2 + $0x60] sm:$0xff]
  %v41 = vld [vmem:[%s2 + $0x68] sm:$0xff]
  %v42 = vld [vmem:[%s2 + $0x70] sm:$0xff]
  %v43 = vld [vmem:[%s2 + $0x78] sm:$0xff]
  %v44 = vld [vmem:[%s2 + $0x80] sm:$0xff]
  %v45 = vld [vmem:[%s2 + $0x88] sm:$0xff]
  %v46 = vld [vmem:[%s2 + $0x90] sm:$0xff]
  %v47 = vld [vmem:[%s2 + $0x98] sm:$0xff]
  %v48 = vld [vmem:[%s2 + $0xa0] sm:$0xff]
  %v49 = vld [vmem:[%s2 + $0xa8] sm:$0xff]
  %v50 = vld [vmem:[%s2 + $0xb0] sm:$0xff]
  %v51 = vld [vmem:[%s2 + $0xb8] sm:$0xff]
  %v52 = vld [vmem:[%s2 + $0xc0] sm:$0xff]
  %v53 = vld [vmem:[%s2 + $0xc8] sm:$0xff]
  %v54 = vld [vmem:[%s2 + $0xd0] sm:$0xff]
  %v55 = vld [vmem:[%s2 + $0xd8] sm:$0xff]
  %v56 = vld [vmem:[%s2 + $0xe0] sm:$0xff]
  %v57 = vld [vmem:[%s2 + $0xe8] sm:$0xff]
  %v58 = vld [vmem:[%s2 + $0xf0] sm:$0xff]
  %v59 = vld [vmem:[%s2 + $0xf8] sm:$0xff]
  %v60 = vld [vmem:[%s2 + $0x100] sm:$0xff]
  %v61 = vld [vmem:[%s2 + $0x108] sm:$0xff]
  %v62 = vld [vmem:[%s2 + $0x110] sm:$0xff]
  %v63 = vld [vmem:[%s2 + $0x118] sm:$0xff]
  %v64 = vld [vmem:[%s2 + $0x120] sm:$0xff]
  %v65 = vld [vmem:[%s2 + $0x128] sm:$0xff]
  %v66 = vld [vmem:[%s2 + $0x130] sm:$0xff]
  %v67 = vld [vmem:[%s2 + $0x138] sm:$0xff]
  %v68 = vld [vmem:[%s2 + $0x140] sm:$0xff]
  %v69 = vld [vmem:[%s2 + $0x148] sm:$0xff]
  %v70 = vld [vmem:[%s2 + $0x150] sm:$0xff]
  %v71 = vld [vmem:[%s2 + $0x158] sm:$0xff]
  %v72 = vld [vmem:[%s2 + $0x160] sm:$0xff]
  %v73 = vld [vmem:[%s2 + $0x168] sm:$0xff]
  %v74 = vld [vmem:[%s2 + $0x170] sm:$0xff]
  %v75 = vld [vmem:[%s2 + $0x178] sm:$0xff]
  %v76 = vld [vmem:[%s2 + $0x180] sm:$0xff]
  %v77 = vld [vmem:[%s2 + $0x188] sm:$0xff]
  %v78 = vld [vmem:[%s2 + $0x190] sm:$0xff]
  %v79 = vld [vmem:[%s2 + $0x198] sm:$0xff]
  %v80 = vld [vmem:[%s2 + $0x1a0] sm:$0xff]
  %v81 = vld [vmem:[%s2 + $0x1a8] sm:$0xff]
  %v82 = vld [vmem:[%s2 + $0x1b0] sm:$0xff]
  %v83 = vld [vmem:[%s2 + $0x1b8] sm:$0xff]
  %v84 = vld [vmem:[%s2 + $0x1c0] sm:$0xff]
  %v85 = vld [vmem:[%s2 + $0x1c8] sm:$0xff]
  %v86 = vld [vmem:[%s2 + $0x1d0] sm:$0xff]
  %v87 = vld [vmem:[%s2 + $0x1d8] sm:$0xff]
  %v88 = vld [vmem:[%s2 + $0x1e0] sm:$0xff]
  %v89 = vld [vmem:[%s2 + $0x1e8] sm:$0xff]
  %v90 = vld [vmem:[%s2 + $0x1f0] sm:$0xff]
  %v91 = vld [vmem:[%s2 + $0x1f8] sm:$0xff]
  %v92 = vld [vmem:[%s2 + $0x200] sm:$0xff]
  %v93 = vld [vmem:[%s2 + $0x208] sm:$0xff]
  %v94 = vld [vmem:[%s2 + $0x210] sm:$0xff]
  %v95 = vld [vmem:[%s2 + $0x218] sm:$0xff]
  %v96 = vld [vmem:[%s2 + $0x220] sm:$0xff]
  %v97 = vld [vmem:[%s2 + $0x228] sm:$0xff]
  %v98 = vld [vmem:[%s2 + $0x230] sm:$0xff]
  %v99 = vld [vmem:[%s2 + $0x238] sm:$0xff]
  %v100 = vld [vmem:[%s2 + $0x240] sm:$0xff]
  %v101 = vld [vmem:[%s2 + $0x248] sm:$0xff]
  %v102 = vld [vmem:[%s2 + $0x250] sm:$0xff]
  %v103 = vld [vmem:[%s2 + $0x258] sm:$0xff]
  %v104 = vld [vmem:[%s2 + $0x260] sm:$0xff]
  %v105 = vld [vmem:[%s2 + $0x268] sm:$0xff]
  %v106 = vld [vmem:[%s2 + $0x270] sm:$0xff]
  %v107 = vld [vmem:[%s2 + $0x278] sm:$0xff]
  %v108 = vld [vmem:[%s2 + $0x280] sm:$0xff]
  %v109 = vld [vmem:[%s2 + $0x288] sm:$0xff]
  %v110 = vld [vmem:[%s2 + $0x290] sm:$0xff]
  %v111 = vld [vmem:[%s2 + $0x298] sm:$0xff]
  %v112 = vld [vmem:[%s2 + $0x2a0] sm:$0xff]
  %v113 = vld [vmem:[%s2 + $0x2a8] sm:$0xff]
  %v114 = vld [vmem:[%s2 + $0x2b0] sm:$0xff]
  %v115 = vld [vmem:[%s2 + $0x2b8] sm:$0xff]
  %v116 = vld [vmem:[%s2 + $0x2c0] sm:$0xff]
  %v117 = vld [vmem:[%s2 + $0x2c8] sm:$0xff]
  %v118 = vld [vmem:[%s2 + $0x2d0] sm:$0xff]
  %v119 = vld [vmem:[%s2 + $0x2d8] sm:$0xff]
  %v120 = vld [vmem:[%s2 + $0x2e0] sm:$0xff]
  %v121 = vld [vmem:[%s2 + $0x2e8] sm:$0xff]
  %v122 = vld [vmem:[%s2 + $0x2f0] sm:$0xff]
  %v123 = vld [vmem:[%s2 + $0x2f8] sm:$0xff]
  %v124 = vld [vmem:[%s2 + $0x300] sm:$0xff]
  %v125 = vld [vmem:[%s2 + $0x308] sm:$0xff]
  %v126 = vld [vmem:[%s2 + $0x310] sm:$0xff]
  %v127 = vld [vmem:[%s2 + $0x318] sm:$0xff]
  %v129 = vlaneseq
  %v130 = vshrl.u32 %v129, 7
  %v131 = vsub.s32 0, %v130
  %v132 = vrot.slane %v27, %v131
  %v133 = vlaneseq
  %v134 = vshrl.u32 %v133, 7
  %v135 = vsub.s32 1, %v134
  %v136 = vrot.slane %v27, %v135
  %v137 = vlaneseq
  %v138 = vshrl.u32 %v137, 7
  %v139 = vsub.s32 2, %v138
  %v140 = vrot.slane %v27, %v139
  %v141 = vlaneseq
  %v142 = vshrl.u32 %v141, 7
  %v143 = vsub.s32 3, %v142
  %v144 = vrot.slane %v27, %v143
  %v145 = vlaneseq
  %v146 = vshrl.u32 %v145, 7
  %v147 = vsub.s32 4, %v146
  %v148 = vrot.slane %v27, %v147
  %v154 = vmul.f32 %v28, %v132
  %v155 = vmul.f32 %v29, %v136
  %v156 = vmul.f32 %v30, %v140
  %v157 = vmul.f32 %v31, %v144
  %v158 = vmul.f32 %v32, %v148
  %v159 = vmul.f32 %v33, %v132
  %v160 = vmul.f32 %v34, %v136
  %v161 = vmul.f32 %v35, %v140
  %v162 = vmul.f32 %v36, %v144
  %v163 = vmul.f32 %v37, %v148
  %v164 = vmul.f32 %v38, %v132
  %v165 = vmul.f32 %v39, %v136
  %v166 = vmul.f32 %v40, %v140
  %v167 = vmul.f32 %v41, %v144
  %v168 = vmul.f32 %v42, %v148
  %v169 = vmul.f32 %v43, %v132
  %v170 = vmul.f32 %v44, %v136
  %v171 = vmul.f32 %v45, %v140
  %v172 = vmul.f32 %v46, %v144
  %v173 = vmul.f32 %v47, %v148
  %v174 = vmul.f32 %v48, %v132
  %v175 = vmul.f32 %v49, %v136
  %v176 = vmul.f32 %v50, %v140
  %v177 = vmul.f32 %v51, %v144
  %v178 = vmul.f32 %v52, %v148
  %v179 = vmul.f32 %v53, %v132
  %v180 = vmul.f32 %v54, %v136
  %v181 = vmul.f32 %v55, %v140
  %v182 = vmul.f32 %v56, %v144
  %v183 = vmul.f32 %v57, %v148
  %v184 = vmul.f32 %v58, %v132
  %v185 = vmul.f32 %v59, %v136
  %v186 = vmul.f32 %v60, %v140
  %v187 = vmul.f32 %v61, %v144
  %v188 = vmul.f32 %v62, %v148
  %v189 = vmul.f32 %v63, %v132
  %v190 = vmul.f32 %v64, %v136
  %v191 = vmul.f32 %v65, %v140
  %v192 = vmul.f32 %v66, %v144
  %v193 = vmul.f32 %v67, %v148
  %v194 = vmul.f32 %v68, %v132
  %v195 = vmul.f32 %v69, %v136
  %v196 = vmul.f32 %v70, %v140
  %v197 = vmul.f32 %v71, %v144
  %v198 = vmul.f32 %v72, %v148
  %v199 = vmul.f32 %v73, %v132
  %v200 = vmul.f32 %v74, %v136
  %v201 = vmul.f32 %v75, %v140
  %v202 = vmul.f32 %v76, %v144
  %v203 = vmul.f32 %v77, %v148
  %v204 = vmul.f32 %v78, %v132
  %v205 = vmul.f32 %v79, %v136
  %v206 = vmul.f32 %v80, %v140
  %v207 = vmul.f32 %v81, %v144
  %v208 = vmul.f32 %v82, %v148
  %v209 = vmul.f32 %v83, %v132
  %v210 = vmul.f32 %v84, %v136
  %v211 = vmul.f32 %v85, %v140
  %v212 = vmul.f32 %v86, %v144
  %v213 = vmul.f32 %v87, %v148
  %v214 = vmul.f32 %v88, %v132
  %v215 = vmul.f32 %v89, %v136
  %v216 = vmul.f32 %v90, %v140
  %v217 = vmul.f32 %v91, %v144
  %v218 = vmul.f32 %v92, %v148
  %v219 = vmul.f32 %v93, %v132
  %v220 = vmul.f32 %v94, %v136
  %v221 = vmul.f32 %v95, %v140
  %v222 = vmul.f32 %v96, %v144
  %v223 = vmul.f32 %v97, %v148
  %v224 = vmul.f32 %v98, %v132
  %v225 = vmul.f32 %v99, %v136
  %v226 = vmul.f32 %v100, %v140
  %v227 = vmul.f32 %v101, %v144
  %v228 = vmul.f32 %v102, %v148
  %v229 = vmul.f32 %v103, %v132
  %v230 = vmul.f32 %v104, %v136
  %v231 = vmul.f32 %v105, %v140
  %v232 = vmul.f32 %v106, %v144
  %v233 = vmul.f32 %v107, %v148
  %v234 = vmul.f32 %v108, %v132
  %v235 = vmul.f32 %v109, %v136
  %v236 = vmul.f32 %v110, %v140
  %v237 = vmul.f32 %v111, %v144
  %v238 = vmul.f32 %v112, %v148
  %v239 = vmul.f32 %v113, %v132
  %v240 = vmul.f32 %v114, %v136
  %v241 = vmul.f32 %v115, %v140
  %v242 = vmul.f32 %v116, %v144
  %v243 = vmul.f32 %v117, %v148
  %v244 = vmul.f32 %v118, %v132
  %v245 = vmul.f32 %v119, %v136
  %v246 = vmul.f32 %v120, %v140
  %v247 = vmul.f32 %v121, %v144
  %v248 = vmul.f32 %v122, %v148
  %v249 = vmul.f32 %v123, %v132
  %v250 = vmul.f32 %v124, %v136
  %v251 = vmul.f32 %v125, %v140
  %v252 = vmul.f32 %v126, %v144
  %v253 = vmul.f32 %v127, %v148
  %v254 = vpack.c.bf16 %v159, %v154
  %v255 = vpack.c.bf16 %v160, %v155
  %v256 = vpack.c.bf16 %v161, %v156
  %v257 = vpack.c.bf16 %v162, %v157
  %v258 = vpack.c.bf16 %v163, %v158
  %v259 = vpack.c.bf16 %v169, %v164
  %v260 = vpack.c.bf16 %v170, %v165
  %v261 = vpack.c.bf16 %v171, %v166
  %v262 = vpack.c.bf16 %v172, %v167
  %v263 = vpack.c.bf16 %v173, %v168
  %v264 = vpack.c.bf16 %v179, %v174
  %v265 = vpack.c.bf16 %v180, %v175
  %v266 = vpack.c.bf16 %v181, %v176
  %v267 = vpack.c.bf16 %v182, %v177
  %v268 = vpack.c.bf16 %v183, %v178
  %v269 = vpack.c.bf16 %v189, %v184
  %v270 = vpack.c.bf16 %v190, %v185
  %v271 = vpack.c.bf16 %v191, %v186
  %v272 = vpack.c.bf16 %v192, %v187
  %v273 = vpack.c.bf16 %v193, %v188
  %v274 = vpack.c.bf16 %v199, %v194
  %v275 = vpack.c.bf16 %v200, %v195
  %v276 = vpack.c.bf16 %v201, %v196
  %v277 = vpack.c.bf16 %v202, %v197
  %v278 = vpack.c.bf16 %v203, %v198
  %v279 = vpack.c.bf16 %v209, %v204
  %v280 = vpack.c.bf16 %v210, %v205
  %v281 = vpack.c.bf16 %v211, %v206
  %v282 = vpack.c.bf16 %v212, %v207
  %v283 = vpack.c.bf16 %v213, %v208
  %v284 = vpack.c.bf16 %v219, %v214
  %v285 = vpack.c.bf16 %v220, %v215
  %v286 = vpack.c.bf16 %v221, %v216
  %v287 = vpack.c.bf16 %v222, %v217
  %v288 = vpack.c.bf16 %v223, %v218
  %v289 = vpack.c.bf16 %v229, %v224
  %v290 = vpack.c.bf16 %v230, %v225
  %v291 = vpack.c.bf16 %v231, %v226
  %v292 = vpack.c.bf16 %v232, %v227
  %v293 = vpack.c.bf16 %v233, %v228
  %v294 = vpack.c.bf16 %v239, %v234
  %v295 = vpack.c.bf16 %v240, %v235
  %v296 = vpack.c.bf16 %v241, %v236
  %v297 = vpack.c.bf16 %v242, %v237
  %v298 = vpack.c.bf16 %v243, %v238
  %v299 = vpack.c.bf16 %v249, %v244
  %v300 = vpack.c.bf16 %v250, %v245
  %v301 = vpack.c.bf16 %v251, %v246
  %v302 = vpack.c.bf16 %v252, %v247
  %v303 = vpack.c.bf16 %v253, %v248
  %v304 = vld [vmem:[%s0] sm:$0xff]
  %v305 = vld [vmem:[%s0 + $0x8] sm:$0xff]
  %v306 = vld [vmem:[%s0 + $0x10] sm:$0xff]
  %v307 = vld [vmem:[%s0 + $0x18] sm:$0xff]
  %v308 = vld [vmem:[%s0 + $0x20] sm:$0xff]
  %v309 = vld [vmem:[%s0 + $0x28] sm:$0xff]
  %v310 = vld [vmem:[%s0 + $0x30] sm:$0xff]
  %v311 = vld [vmem:[%s0 + $0x38] sm:$0xff]
  %v312 = vld [vmem:[%s0 + $0x40] sm:$0xff]
  %v313 = vld [vmem:[%s0 + $0x48] sm:$0xff]
  %v314 = vld [vmem:[%s0 + $0x50] sm:$0xff]
  %v315 = vld [vmem:[%s0 + $0x58] sm:$0xff]
  %v316 = vld [vmem:[%s0 + $0x60] sm:$0xff]
  %v317 = vld [vmem:[%s0 + $0x68] sm:$0xff]
  %v318 = vld [vmem:[%s0 + $0x70] sm:$0xff]
  %v319 = vld [vmem:[%s0 + $0x78] sm:$0xff]
  %v320 = vld [vmem:[%s0 + $0x80] sm:$0xff]
  %v321 = vld [vmem:[%s0 + $0x88] sm:$0xff]
  %v322 = vld [vmem:[%s0 + $0x90] sm:$0xff]
  %v323 = vld [vmem:[%s0 + $0x98] sm:$0xff]
  %v324 = vld [vmem:[%s0 + $0xa0] sm:$0xff]
  %v325 = vld [vmem:[%s0 + $0xa8] sm:$0xff]
  %v326 = vld [vmem:[%s0 + $0xb0] sm:$0xff]
  %v327 = vld [vmem:[%s0 + $0xb8] sm:$0xff]
  %v328 = vld [vmem:[%s0 + $0xc0] sm:$0xff]
  %v329 = vld [vmem:[%s0 + $0xc8] sm:$0xff]
  %v330 = vld [vmem:[%s0 + $0xd0] sm:$0xff]
  %v331 = vld [vmem:[%s0 + $0xd8] sm:$0xff]
  %v332 = vld [vmem:[%s0 + $0xe0] sm:$0xff]
  %v333 = vld [vmem:[%s0 + $0xe8] sm:$0xff]
  %v334 = vld [vmem:[%s0 + $0xf0] sm:$0xff]
  %v335 = vld [vmem:[%s0 + $0xf8] sm:$0xff]
  %v336 = vld [vmem:[%s0 + $0x100] sm:$0xff]
  %v337 = vld [vmem:[%s0 + $0x108] sm:$0xff]
  %v338 = vld [vmem:[%s0 + $0x110] sm:$0xff]
  %v339 = vld [vmem:[%s0 + $0x118] sm:$0xff]
  %v340 = vld [vmem:[%s0 + $0x120] sm:$0xff]
  %v341 = vld [vmem:[%s0 + $0x128] sm:$0xff]
  %v342 = vld [vmem:[%s0 + $0x130] sm:$0xff]
  %v343 = vld [vmem:[%s0 + $0x138] sm:$0xff]
  %v344 = vld [vmem:[%s0 + $0x140] sm:$0xff]
  %v345 = vld [vmem:[%s0 + $0x148] sm:$0xff]
  %v346 = vld [vmem:[%s0 + $0x150] sm:$0xff]
  %v347 = vld [vmem:[%s0 + $0x158] sm:$0xff]
  %v348 = vld [vmem:[%s0 + $0x160] sm:$0xff]
  %v349 = vld [vmem:[%s0 + $0x168] sm:$0xff]
  %v350 = vld [vmem:[%s0 + $0x170] sm:$0xff]
  %v351 = vld [vmem:[%s0 + $0x178] sm:$0xff]
  %v352 = vld [vmem:[%s0 + $0x180] sm:$0xff]
  %v353 = vld [vmem:[%s0 + $0x188] sm:$0xff]
  %v354 = vld [vmem:[%s0 + $0x190] sm:$0xff]
  %v355 = vld [vmem:[%s0 + $0x198] sm:$0xff]
  %v356 = vld [vmem:[%s0 + $0x1a0] sm:$0xff]
  %v357 = vld [vmem:[%s0 + $0x1a8] sm:$0xff]
  %v358 = vld [vmem:[%s0 + $0x1b0] sm:$0xff]
  %v359 = vld [vmem:[%s0 + $0x1b8] sm:$0xff]
  %v360 = vld [vmem:[%s0 + $0x1c0] sm:$0xff]
  %v361 = vld [vmem:[%s0 + $0x1c8] sm:$0xff]
  %v362 = vld [vmem:[%s0 + $0x1d0] sm:$0xff]
  %v363 = vld [vmem:[%s0 + $0x1d8] sm:$0xff]
  %v364 = vld [vmem:[%s0 + $0x1e0] sm:$0xff]
  %v365 = vld [vmem:[%s0 + $0x1e8] sm:$0xff]
  %v366 = vld [vmem:[%s0 + $0x1f0] sm:$0xff]
  %v367 = vld [vmem:[%s0 + $0x1f8] sm:$0xff]
  %v368 = vld [vmem:[%s0 + $0x200] sm:$0xff]
  %v369 = vld [vmem:[%s0 + $0x208] sm:$0xff]
  %v370 = vld [vmem:[%s0 + $0x210] sm:$0xff]
  %v371 = vld [vmem:[%s0 + $0x218] sm:$0xff]
  %v372 = vld [vmem:[%s0 + $0x220] sm:$0xff]
  %v373 = vld [vmem:[%s0 + $0x228] sm:$0xff]
  %v374 = vld [vmem:[%s0 + $0x230] sm:$0xff]
  %v375 = vld [vmem:[%s0 + $0x238] sm:$0xff]
  %v376 = vld [vmem:[%s0 + $0x240] sm:$0xff]
  %v377 = vld [vmem:[%s0 + $0x248] sm:$0xff]
  %v378 = vld [vmem:[%s0 + $0x250] sm:$0xff]
  %v379 = vld [vmem:[%s0 + $0x258] sm:$0xff]
  %v380 = vld [vmem:[%s0 + $0x260] sm:$0xff]
  %v381 = vld [vmem:[%s0 + $0x268] sm:$0xff]
  %v382 = vld [vmem:[%s0 + $0x270] sm:$0xff]
  %v383 = vld [vmem:[%s0 + $0x278] sm:$0xff]
  %v384 = vld [vmem:[%s0 + $0x280] sm:$0xff]
  %v385 = vld [vmem:[%s0 + $0x288] sm:$0xff]
  %v386 = vld [vmem:[%s0 + $0x290] sm:$0xff]
  %v387 = vld [vmem:[%s0 + $0x298] sm:$0xff]
  %v388 = vld [vmem:[%s0 + $0x2a0] sm:$0xff]
  %v389 = vld [vmem:[%s0 + $0x2a8] sm:$0xff]
  %v390 = vld [vmem:[%s0 + $0x2b0] sm:$0xff]
  %v391 = vld [vmem:[%s0 + $0x2b8] sm:$0xff]
  %v392 = vld [vmem:[%s0 + $0x2c0] sm:$0xff]
  %v393 = vld [vmem:[%s0 + $0x2c8] sm:$0xff]
  %v394 = vld [vmem:[%s0 + $0x2d0] sm:$0xff]
  %v395 = vld [vmem:[%s0 + $0x2d8] sm:$0xff]
  %v396 = vld [vmem:[%s0 + $0x2e0] sm:$0xff]
  %v397 = vld [vmem:[%s0 + $0x2e8] sm:$0xff]
  %v398 = vld [vmem:[%s0 + $0x2f0] sm:$0xff]
  %v399 = vld [vmem:[%s0 + $0x2f8] sm:$0xff]
  %v400 = vld [vmem:[%s0 + $0x300] sm:$0xff]
  %v401 = vld [vmem:[%s0 + $0x308] sm:$0xff]
  %v402 = vld [vmem:[%s0 + $0x310] sm:$0xff]
  %v403 = vld [vmem:[%s0 + $0x318] sm:$0xff]
  %v404 = vld [vmem:[%s0 + $0x320] sm:$0xff]
  %v405 = vld [vmem:[%s0 + $0x328] sm:$0xff]
  %v406 = vld [vmem:[%s0 + $0x330] sm:$0xff]
  %v407 = vld [vmem:[%s0 + $0x338] sm:$0xff]
  %v408 = vld [vmem:[%s0 + $0x340] sm:$0xff]
  %v409 = vld [vmem:[%s0 + $0x348] sm:$0xff]
  %v410 = vld [vmem:[%s0 + $0x350] sm:$0xff]
  %v411 = vld [vmem:[%s0 + $0x358] sm:$0xff]
  %v412 = vld [vmem:[%s0 + $0x360] sm:$0xff]
  %v413 = vld [vmem:[%s0 + $0x368] sm:$0xff]
  %v414 = vld [vmem:[%s0 + $0x370] sm:$0xff]
  %v415 = vld [vmem:[%s0 + $0x378] sm:$0xff]
  %v416 = vld [vmem:[%s0 + $0x380] sm:$0xff]
  %v417 = vld [vmem:[%s0 + $0x388] sm:$0xff]
  %v418 = vld [vmem:[%s0 + $0x390] sm:$0xff]
  %v419 = vld [vmem:[%s0 + $0x398] sm:$0xff]
  %v420 = vld [vmem:[%s0 + $0x3a0] sm:$0xff]
  %v421 = vld [vmem:[%s0 + $0x3a8] sm:$0xff]
  %v422 = vld [vmem:[%s0 + $0x3b0] sm:$0xff]
  %v423 = vld [vmem:[%s0 + $0x3b8] sm:$0xff]
  %v424 = vld [vmem:[%s0 + $0x3c0] sm:$0xff]
  %v425 = vld [vmem:[%s0 + $0x3c8] sm:$0xff]
  %v426 = vld [vmem:[%s0 + $0x3d0] sm:$0xff]
  %v427 = vld [vmem:[%s0 + $0x3d8] sm:$0xff]
  %v428 = vld [vmem:[%s0 + $0x3e0] sm:$0xff]
  %v429 = vld [vmem:[%s0 + $0x3e8] sm:$0xff]
  %v430 = vld [vmem:[%s0 + $0x3f0] sm:$0xff]
  %v431 = vld [vmem:[%s0 + $0x3f8] sm:$0xff]
  %v432 = vld [vmem:[%s0 + $0x400] sm:$0xff]
  %v433 = vld [vmem:[%s0 + $0x408] sm:$0xff]
  %v434 = vld [vmem:[%s0 + $0x410] sm:$0xff]
  %v435 = vld [vmem:[%s0 + $0x418] sm:$0xff]
  %v436 = vld [vmem:[%s0 + $0x420] sm:$0xff]
  %v437 = vld [vmem:[%s0 + $0x428] sm:$0xff]
  %v438 = vld [vmem:[%s0 + $0x430] sm:$0xff]
  %v439 = vld [vmem:[%s0 + $0x438] sm:$0xff]
  %v440 = vld [vmem:[%s0 + $0x440] sm:$0xff]
  %v441 = vld [vmem:[%s0 + $0x448] sm:$0xff]
  %v442 = vld [vmem:[%s0 + $0x450] sm:$0xff]
  %v443 = vld [vmem:[%s0 + $0x458] sm:$0xff]
  %v444 = vld [vmem:[%s0 + $0x460] sm:$0xff]
  %v445 = vld [vmem:[%s0 + $0x468] sm:$0xff]
  %v446 = vld [vmem:[%s0 + $0x470] sm:$0xff]
  %v447 = vld [vmem:[%s0 + $0x478] sm:$0xff]
  %v448 = vld [vmem:[%s0 + $0x480] sm:$0xff]
  %v449 = vld [vmem:[%s0 + $0x488] sm:$0xff]
  %v450 = vld [vmem:[%s0 + $0x490] sm:$0xff]
  %v451 = vld [vmem:[%s0 + $0x498] sm:$0xff]
  %v452 = vld [vmem:[%s0 + $0x4a0] sm:$0xff]
  %v453 = vld [vmem:[%s0 + $0x4a8] sm:$0xff]
  %v454 = vld [vmem:[%s0 + $0x4b0] sm:$0xff]
  %v455 = vld [vmem:[%s0 + $0x4b8] sm:$0xff]
  %v456 = vld [vmem:[%s0 + $0x4c0] sm:$0xff]
  %v457 = vld [vmem:[%s0 + $0x4c8] sm:$0xff]
  %v458 = vld [vmem:[%s0 + $0x4d0] sm:$0xff]
  %v459 = vld [vmem:[%s0 + $0x4d8] sm:$0xff]
  %v460 = vld [vmem:[%s0 + $0x4e0] sm:$0xff]
  %v461 = vld [vmem:[%s0 + $0x4e8] sm:$0xff]
  %v462 = vld [vmem:[%s0 + $0x4f0] sm:$0xff]
  %v463 = vld [vmem:[%s0 + $0x4f8] sm:$0xff]
  %v464 = vpack.c.bf16 %v306, %v304
  %v465 = vpack.c.bf16 %v307, %v305
  %v466 = vpack.c.bf16 %v310, %v308
  %v467 = vpack.c.bf16 %v311, %v309
  %v468 = vpack.c.bf16 %v314, %v312
  %v469 = vpack.c.bf16 %v315, %v313
  %v470 = vpack.c.bf16 %v318, %v316
  %v471 = vpack.c.bf16 %v319, %v317
  %v472 = vpack.c.bf16 %v322, %v320
  %v473 = vpack.c.bf16 %v323, %v321
  %v474 = vpack.c.bf16 %v326, %v324
  %v475 = vpack.c.bf16 %v327, %v325
  %v476 = vpack.c.bf16 %v330, %v328
  %v477 = vpack.c.bf16 %v331, %v329
  %v478 = vpack.c.bf16 %v334, %v332
  %v479 = vpack.c.bf16 %v335, %v333
  %v480 = vpack.c.bf16 %v338, %v336
  %v481 = vpack.c.bf16 %v339, %v337
  %v482 = vpack.c.bf16 %v342, %v340
  %v483 = vpack.c.bf16 %v343, %v341
  %v484 = vpack.c.bf16 %v346, %v344
  %v485 = vpack.c.bf16 %v347, %v345
  %v486 = vpack.c.bf16 %v350, %v348
  %v487 = vpack.c.bf16 %v351, %v349
  %v488 = vpack.c.bf16 %v354, %v352
  %v489 = vpack.c.bf16 %v355, %v353
  %v490 = vpack.c.bf16 %v358, %v356
  %v491 = vpack.c.bf16 %v359, %v357
  %v492 = vpack.c.bf16 %v362, %v360
  %v493 = vpack.c.bf16 %v363, %v361
  %v494 = vpack.c.bf16 %v366, %v364
  %v495 = vpack.c.bf16 %v367, %v365
  %v496 = vpack.c.bf16 %v370, %v368
  %v497 = vpack.c.bf16 %v371, %v369
  %v498 = vpack.c.bf16 %v374, %v372
  %v499 = vpack.c.bf16 %v375, %v373
  %v500 = vpack.c.bf16 %v378, %v376
  %v501 = vpack.c.bf16 %v379, %v377
  %v502 = vpack.c.bf16 %v382, %v380
  %v503 = vpack.c.bf16 %v383, %v381
  %v504 = vpack.c.bf16 %v386, %v384
  %v505 = vpack.c.bf16 %v387, %v385
  %v506 = vpack.c.bf16 %v390, %v388
  %v507 = vpack.c.bf16 %v391, %v389
  %v508 = vpack.c.bf16 %v394, %v392
  %v509 = vpack.c.bf16 %v395, %v393
  %v510 = vpack.c.bf16 %v398, %v396
  %v511 = vpack.c.bf16 %v399, %v397
  %v512 = vpack.c.bf16 %v402, %v400
  %v513 = vpack.c.bf16 %v403, %v401
  %v514 = vpack.c.bf16 %v406, %v404
  %v515 = vpack.c.bf16 %v407, %v405
  %v516 = vpack.c.bf16 %v410, %v408
  %v517 = vpack.c.bf16 %v411, %v409
  %v518 = vpack.c.bf16 %v414, %v412
  %v519 = vpack.c.bf16 %v415, %v413
  %v520 = vpack.c.bf16 %v418, %v416
  %v521 = vpack.c.bf16 %v419, %v417
  %v522 = vpack.c.bf16 %v422, %v420
  %v523 = vpack.c.bf16 %v423, %v421
  %v524 = vpack.c.bf16 %v426, %v424
  %v525 = vpack.c.bf16 %v427, %v425
  %v526 = vpack.c.bf16 %v430, %v428
  %v527 = vpack.c.bf16 %v431, %v429
  %v528 = vpack.c.bf16 %v434, %v432
  %v529 = vpack.c.bf16 %v435, %v433
  %v530 = vpack.c.bf16 %v438, %v436
  %v531 = vpack.c.bf16 %v439, %v437
  %v532 = vpack.c.bf16 %v442, %v440
  %v533 = vpack.c.bf16 %v443, %v441
  %v534 = vpack.c.bf16 %v446, %v444
  %v535 = vpack.c.bf16 %v447, %v445
  %v536 = vpack.c.bf16 %v450, %v448
  %v537 = vpack.c.bf16 %v451, %v449
  %v538 = vpack.c.bf16 %v454, %v452
  %v539 = vpack.c.bf16 %v455, %v453
  %v540 = vpack.c.bf16 %v458, %v456
  %v541 = vpack.c.bf16 %v459, %v457
  %v542 = vpack.c.bf16 %v462, %v460
  %v543 = vpack.c.bf16 %v463, %v461
  %544 = vmatprep.subr.bf16.mxu0 %v479
  %545 = vmatpush1.bf16.msra.mxu0 %v478
  %546 = vmatprep.subr.bf16.mxu0 %v477
  %547 = vmatpush1.bf16.msra.mxu0 %v476
  %548 = vmatprep.subr.bf16.mxu0 %v475
  %549 = vmatpush1.bf16.msra.mxu0 %v474
  %550 = vmatprep.subr.bf16.mxu0 %v473
  %551 = vmatpush1.bf16.msra.mxu0 %v472
  %552 = vmatprep.subr.bf16.mxu0 %v471
  %553 = vmatpush1.bf16.msra.mxu0 %v470
  %554 = vmatprep.subr.bf16.mxu0 %v469
  %555 = vmatpush1.bf16.msra.mxu0 %v468
  %556 = vmatprep.subr.bf16.mxu0 %v467
  %557 = vmatpush1.bf16.msra.mxu0 %v466
  %558 = vmatprep.subr.bf16.mxu0 %v465
  %559 = vmatpush1.bf16.msra.mxu0 %v464
  %560 = vmatprep.subr.bf16.mxu0 %v495
  %561 = vmatpush2.bf16.msra.mxu0 %v494
  %562 = vmatprep.subr.bf16.mxu0 %v493
  %563 = vmatpush2.bf16.msra.mxu0 %v492
  %564 = vmatprep.subr.bf16.mxu0 %v491
  %565 = vmatpush2.bf16.msra.mxu0 %v490
  %566 = vmatprep.subr.bf16.mxu0 %v489
  %567 = vmatpush2.bf16.msra.mxu0 %v488
  %568 = vmatprep.subr.bf16.mxu0 %v487
  %569 = vmatpush2.bf16.msra.mxu0 %v486
  %570 = vmatprep.subr.bf16.mxu0 %v485
  %571 = vmatpush2.bf16.msra.mxu0 %v484
  %572 = vmatprep.subr.bf16.mxu0 %v483
  %573 = vmatpush2.bf16.msra.mxu0 %v482
  %574 = vmatprep.subr.bf16.mxu0 %v481
  %575 = vmatpush2.bf16.msra.mxu0 %v480
  %576 = vmatprep.mubr.bf16.mxu0 %v255
  %577 = vmatmul.mubr.bf16.gmra.mxu0 %v254
  %v578 = vpop.f32.mrf.mxu0
  %v579 = vadd.f32 0.0, %v578
  %v580 = vpop.f32.mrf.mxu0
  %v581 = vadd.f32 0.0, %v580
  %v582 = vpop.f32.mrf.mxu0
  %v583 = vadd.f32 0.0, %v582
  %v584 = vpop.f32.mrf.mxu0
  %v585 = vadd.f32 0.0, %v584
  %586 = vmatprep.mubr.bf16.mxu0 %v260
  %587 = vmatmul.mubr.bf16.gmra.mxu0 %v259
  %v588 = vpop.f32.mrf.mxu0
  %v589 = vadd.f32 0.0, %v588
  %v590 = vpop.f32.mrf.mxu0
  %v591 = vadd.f32 0.0, %v590
  %v592 = vpop.f32.mrf.mxu0
  %v593 = vadd.f32 0.0, %v592
  %v594 = vpop.f32.mrf.mxu0
  %v595 = vadd.f32 0.0, %v594
  %596 = vmatprep.mubr.bf16.mxu0 %v265
  %597 = vmatmul.mubr.bf16.gmra.mxu0 %v264
  %v598 = vpop.f32.mrf.mxu0
  %v599 = vadd.f32 0.0, %v598
  %v600 = vpop.f32.mrf.mxu0
  %v601 = vadd.f32 0.0, %v600
  %v602 = vpop.f32.mrf.mxu0
  %v603 = vadd.f32 0.0, %v602
  %v604 = vpop.f32.mrf.mxu0
  %v605 = vadd.f32 0.0, %v604
  %606 = vmatprep.mubr.bf16.mxu0 %v270
  %607 = vmatmul.mubr.bf16.gmra.mxu0 %v269
  %v608 = vpop.f32.mrf.mxu0
  %v609 = vadd.f32 0.0, %v608
  %v610 = vpop.f32.mrf.mxu0
  %v611 = vadd.f32 0.0, %v610
  %v612 = vpop.f32.mrf.mxu0
  %v613 = vadd.f32 0.0, %v612
  %v614 = vpop.f32.mrf.mxu0
  %v615 = vadd.f32 0.0, %v614
  %616 = vmatprep.mubr.bf16.mxu0 %v275
  %617 = vmatmul.mubr.bf16.gmra.mxu0 %v274
  %v618 = vpop.f32.mrf.mxu0
  %v619 = vadd.f32 0.0, %v618
  %v620 = vpop.f32.mrf.mxu0
  %v621 = vadd.f32 0.0, %v620
  %v622 = vpop.f32.mrf.mxu0
  %v623 = vadd.f32 0.0, %v622
  %v624 = vpop.f32.mrf.mxu0
  %v625 = vadd.f32 0.0, %v624
  %626 = vmatprep.mubr.bf16.mxu0 %v280
  %627 = vmatmul.mubr.bf16.gmra.mxu0 %v279
  %v628 = vpop.f32.mrf.mxu0
  %v629 = vadd.f32 0.0, %v628
  %v630 = vpop.f32.mrf.mxu0
  %v631 = vadd.f32 0.0, %v630
  %v632 = vpop.f32.mrf.mxu0
  %v633 = vadd.f32 0.0, %v632
  %v634 = vpop.f32.mrf.mxu0
  %v635 = vadd.f32 0.0, %v634
  %636 = vmatprep.mubr.bf16.mxu0 %v285
  %637 = vmatmul.mubr.bf16.gmra.mxu0 %v284
  %v638 = vpop.f32.mrf.mxu0
  %v639 = vadd.f32 0.0, %v638
  %v640 = vpop.f32.mrf.mxu0
  %v641 = vadd.f32 0.0, %v640
  %v642 = vpop.f32.mrf.mxu0
  %v643 = vadd.f32 0.0, %v642
  %v644 = vpop.f32.mrf.mxu0
  %v645 = vadd.f32 0.0, %v644
  %646 = vmatprep.mubr.bf16.mxu0 %v290
  %647 = vmatmul.mubr.bf16.gmra.mxu0 %v289
  %v648 = vpop.f32.mrf.mxu0
  %v649 = vadd.f32 0.0, %v648
  %v650 = vpop.f32.mrf.mxu0
  %v651 = vadd.f32 0.0, %v650
  %v652 = vpop.f32.mrf.mxu0
  %v653 = vadd.f32 0.0, %v652
  %v654 = vpop.f32.mrf.mxu0
  %v655 = vadd.f32 0.0, %v654
  %656 = vmatprep.mubr.bf16.mxu0 %v295
  %657 = vmatmul.mubr.bf16.gmra.mxu0 %v294
  %v658 = vpop.f32.mrf.mxu0
  %v659 = vadd.f32 0.0, %v658
  %v660 = vpop.f32.mrf.mxu0
  %v661 = vadd.f32 0.0, %v660
  %v662 = vpop.f32.mrf.mxu0
  %v663 = vadd.f32 0.0, %v662
  %v664 = vpop.f32.mrf.mxu0
  %v665 = vadd.f32 0.0, %v664
  %666 = vmatprep.mubr.bf16.mxu0 %v300
  %667 = vmatmul.mubr.bf16.gmra.mxu0 %v299
  %v668 = vpop.f32.mrf.mxu0
  %v669 = vadd.f32 0.0, %v668
  %v670 = vpop.f32.mrf.mxu0
  %v671 = vadd.f32 0.0, %v670
  %v672 = vpop.f32.mrf.mxu0
  %v673 = vadd.f32 0.0, %v672
  %v674 = vpop.f32.mrf.mxu0
  %v675 = vadd.f32 0.0, %v674
  %676 = vdwg.mxu0
  %677 = vmatprep.subr.bf16.mxu0 %v511
  %678 = vmatpush1.bf16.msra.mxu0 %v510
  %679 = vmatprep.subr.bf16.mxu0 %v509
  %680 = vmatpush1.bf16.msra.mxu0 %v508
  %681 = vmatprep.subr.bf16.mxu0 %v507
  %682 = vmatpush1.bf16.msra.mxu0 %v506
  %683 = vmatprep.subr.bf16.mxu0 %v505
  %684 = vmatpush1.bf16.msra.mxu0 %v504
  %685 = vmatprep.subr.bf16.mxu0 %v503
  %686 = vmatpush1.bf16.msra.mxu0 %v502
  %687 = vmatprep.subr.bf16.mxu0 %v501
  %688 = vmatpush1.bf16.msra.mxu0 %v500
  %689 = vmatprep.subr.bf16.mxu0 %v499
  %690 = vmatpush1.bf16.msra.mxu0 %v498
  %691 = vmatprep.subr.bf16.mxu0 %v497
  %692 = vmatpush1.bf16.msra.mxu0 %v496
  %693 = vmatprep.subr.bf16.mxu0 %v527
  %694 = vmatpush2.bf16.msra.mxu0 %v526
  %695 = vmatprep.subr.bf16.mxu0 %v525
  %696 = vmatpush2.bf16.msra.mxu0 %v524
  %697 = vmatprep.subr.bf16.mxu0 %v523
  %698 = vmatpush2.bf16.msra.mxu0 %v522
  %699 = vmatprep.subr.bf16.mxu0 %v521
  %700 = vmatpush2.bf16.msra.mxu0 %v520
  %701 = vmatprep.subr.bf16.mxu0 %v519
  %702 = vmatpush2.bf16.msra.mxu0 %v518
  %703 = vmatprep.subr.bf16.mxu0 %v517
  %704 = vmatpush2.bf16.msra.mxu0 %v516
  %705 = vmatprep.subr.bf16.mxu0 %v515
  %706 = vmatpush2.bf16.msra.mxu0 %v514
  %707 = vmatprep.subr.bf16.mxu0 %v513
  %708 = vmatpush2.bf16.msra.mxu0 %v512
  %709 = vmatprep.mubr.bf16.mxu0 %v257
  %710 = vmatmul.mubr.bf16.gmra.mxu0 %v256
  %v711 = vpop.f32.mrf.mxu0
  %v712 = vadd.f32 %v579, %v711
  %v713 = vpop.f32.mrf.mxu0
  %v714 = vadd.f32 %v581, %v713
  %v715 = vpop.f32.mrf.mxu0
  %v716 = vadd.f32 %v583, %v715
  %v717 = vpop.f32.mrf.mxu0
  %v718 = vadd.f32 %v585, %v717
  %719 = vmatprep.mubr.bf16.mxu0 %v262
  %720 = vmatmul.mubr.bf16.gmra.mxu0 %v261
  %v721 = vpop.f32.mrf.mxu0
  %v722 = vadd.f32 %v589, %v721
  %v723 = vpop.f32.mrf.mxu0
  %v724 = vadd.f32 %v591, %v723
  %v725 = vpop.f32.mrf.mxu0
  %v726 = vadd.f32 %v593, %v725
  %v727 = vpop.f32.mrf.mxu0
  %v728 = vadd.f32 %v595, %v727
  %729 = vmatprep.mubr.bf16.mxu0 %v267
  %730 = vmatmul.mubr.bf16.gmra.mxu0 %v266
  %v731 = vpop.f32.mrf.mxu0
  %v732 = vadd.f32 %v599, %v731
  %v733 = vpop.f32.mrf.mxu0
  %v734 = vadd.f32 %v601, %v733
  %v735 = vpop.f32.mrf.mxu0
  %v736 = vadd.f32 %v603, %v735
  %v737 = vpop.f32.mrf.mxu0
  %v738 = vadd.f32 %v605, %v737
  %739 = vmatprep.mubr.bf16.mxu0 %v272
  %740 = vmatmul.mubr.bf16.gmra.mxu0 %v271
  %v741 = vpop.f32.mrf.mxu0
  %v742 = vadd.f32 %v609, %v741
  %v743 = vpop.f32.mrf.mxu0
  %v744 = vadd.f32 %v611, %v743
  %v745 = vpop.f32.mrf.mxu0
  %v746 = vadd.f32 %v613, %v745
  %v747 = vpop.f32.mrf.mxu0
  %v748 = vadd.f32 %v615, %v747
  %749 = vmatprep.mubr.bf16.mxu0 %v277
  %750 = vmatmul.mubr.bf16.gmra.mxu0 %v276
  %v751 = vpop.f32.mrf.mxu0
  %v752 = vadd.f32 %v619, %v751
  %v753 = vpop.f32.mrf.mxu0
  %v754 = vadd.f32 %v621, %v753
  %v755 = vpop.f32.mrf.mxu0
  %v756 = vadd.f32 %v623, %v755
  %v757 = vpop.f32.mrf.mxu0
  %v758 = vadd.f32 %v625, %v757
  %759 = vmatprep.mubr.bf16.mxu0 %v282
  %760 = vmatmul.mubr.bf16.gmra.mxu0 %v281
  %v761 = vpop.f32.mrf.mxu0
  %v762 = vadd.f32 %v629, %v761
  %v763 = vpop.f32.mrf.mxu0
  %v764 = vadd.f32 %v631, %v763
  %v765 = vpop.f32.mrf.mxu0
  %v766 = vadd.f32 %v633, %v765
  %v767 = vpop.f32.mrf.mxu0
  %v768 = vadd.f32 %v635, %v767
  %769 = vmatprep.mubr.bf16.mxu0 %v287
  %770 = vmatmul.mubr.bf16.gmra.mxu0 %v286
  %v771 = vpop.f32.mrf.mxu0
  %v772 = vadd.f32 %v639, %v771
  %v773 = vpop.f32.mrf.mxu0
  %v774 = vadd.f32 %v641, %v773
  %v775 = vpop.f32.mrf.mxu0
  %v776 = vadd.f32 %v643, %v775
  %v777 = vpop.f32.mrf.mxu0
  %v778 = vadd.f32 %v645, %v777
  %779 = vmatprep.mubr.bf16.mxu0 %v292
  %780 = vmatmul.mubr.bf16.gmra.mxu0 %v291
  %v781 = vpop.f32.mrf.mxu0
  %v782 = vadd.f32 %v649, %v781
  %v783 = vpop.f32.mrf.mxu0
  %v784 = vadd.f32 %v651, %v783
  %v785 = vpop.f32.mrf.mxu0
  %v786 = vadd.f32 %v653, %v785
  %v787 = vpop.f32.mrf.mxu0
  %v788 = vadd.f32 %v655, %v787
  %789 = vmatprep.mubr.bf16.mxu0 %v297
  %790 = vmatmul.mubr.bf16.gmra.mxu0 %v296
  %v791 = vpop.f32.mrf.mxu0
  %v792 = vadd.f32 %v659, %v791
  %v793 = vpop.f32.mrf.mxu0
  %v794 = vadd.f32 %v661, %v793
  %v795 = vpop.f32.mrf.mxu0
  %v796 = vadd.f32 %v663, %v795
  %v797 = vpop.f32.mrf.mxu0
  %v798 = vadd.f32 %v665, %v797
  %799 = vmatprep.mubr.bf16.mxu0 %v302
  %800 = vmatmul.mubr.bf16.gmra.mxu0 %v301
  %v801 = vpop.f32.mrf.mxu0
  %v802 = vadd.f32 %v669, %v801
  %v803 = vpop.f32.mrf.mxu0
  %v804 = vadd.f32 %v671, %v803
  %v805 = vpop.f32.mrf.mxu0
  %v806 = vadd.f32 %v673, %v805
  %v807 = vpop.f32.mrf.mxu0
  %v808 = vadd.f32 %v675, %v807
  %809 = vdwg.mxu0
  %810 = vmatprep.subr.bf16.mxu0 %v543
  %811 = vmatpush1.bf16.msra.mxu0 %v542
  %812 = vmatprep.subr.bf16.mxu0 %v541
  %813 = vmatpush1.bf16.msra.mxu0 %v540
  %814 = vmatprep.subr.bf16.mxu0 %v539
  %815 = vmatpush1.bf16.msra.mxu0 %v538
  %816 = vmatprep.subr.bf16.mxu0 %v537
  %817 = vmatpush1.bf16.msra.mxu0 %v536
  %818 = vmatprep.subr.bf16.mxu0 %v535
  %819 = vmatpush1.bf16.msra.mxu0 %v534
  %820 = vmatprep.subr.bf16.mxu0 %v533
  %821 = vmatpush1.bf16.msra.mxu0 %v532
  %822 = vmatprep.subr.bf16.mxu0 %v531
  %823 = vmatpush1.bf16.msra.mxu0 %v530
  %824 = vmatprep.subr.bf16.mxu0 %v529
  %825 = vmatpush1.bf16.msra.mxu0 %v528
  %826 = vmatprep.subr.bf16.mxu0 0
  %827 = vmatpush2.bf16.msra.mxu0 0
  %828 = vmatprep.subr.bf16.mxu0 0
  %829 = vmatpush2.bf16.msra.mxu0 0
  %830 = vmatprep.subr.bf16.mxu0 0
  %831 = vmatpush2.bf16.msra.mxu0 0
  %832 = vmatprep.subr.bf16.mxu0 0
  %833 = vmatpush2.bf16.msra.mxu0 0
  %834 = vmatprep.subr.bf16.mxu0 0
  %835 = vmatpush2.bf16.msra.mxu0 0
  %836 = vmatprep.subr.bf16.mxu0 0
  %837 = vmatpush2.bf16.msra.mxu0 0
  %838 = vmatprep.subr.bf16.mxu0 0
  %839 = vmatpush2.bf16.msra.mxu0 0
  %840 = vmatprep.subr.bf16.mxu0 0
  %841 = vmatpush2.bf16.msra.mxu0 0
  %842 = vmatprep.mubr.bf16.mxu0 0
  %843 = vmatmul.mubr.bf16.gmra.mxu0 %v258
  %v844 = vpop.f32.mrf.mxu0
  %v845 = vadd.f32 %v712, %v844
  %v846 = vpop.f32.mrf.mxu0
  %v847 = vadd.f32 %v714, %v846
  %v848 = vpop.f32.mrf.mxu0
  %v849 = vadd.f32 %v716, %v848
  %v850 = vpop.f32.mrf.mxu0
  %v851 = vadd.f32 %v718, %v850
  %852 = vmatprep.mubr.bf16.mxu0 0
  %853 = vmatmul.mubr.bf16.gmra.mxu0 %v263
  %v854 = vpop.f32.mrf.mxu0
  %v855 = vadd.f32 %v722, %v854
  %v856 = vpop.f32.mrf.mxu0
  %v857 = vadd.f32 %v724, %v856
  %v858 = vpop.f32.mrf.mxu0
  %v859 = vadd.f32 %v726, %v858
  %v860 = vpop.f32.mrf.mxu0
  %v861 = vadd.f32 %v728, %v860
  %862 = vmatprep.mubr.bf16.mxu0 0
  %863 = vmatmul.mubr.bf16.gmra.mxu0 %v268
  %v864 = vpop.f32.mrf.mxu0
  %v865 = vadd.f32 %v732, %v864
  %v866 = vpop.f32.mrf.mxu0
  %v867 = vadd.f32 %v734, %v866
  %v868 = vpop.f32.mrf.mxu0
  %v869 = vadd.f32 %v736, %v868
  %v870 = vpop.f32.mrf.mxu0
  %v871 = vadd.f32 %v738, %v870
  %872 = vmatprep.mubr.bf16.mxu0 0
  %873 = vmatmul.mubr.bf16.gmra.mxu0 %v273
  %v874 = vpop.f32.mrf.mxu0
  %v875 = vadd.f32 %v742, %v874
  %v876 = vpop.f32.mrf.mxu0
  %v877 = vadd.f32 %v744, %v876
  %v878 = vpop.f32.mrf.mxu0
  %v879 = vadd.f32 %v746, %v878
  %v880 = vpop.f32.mrf.mxu0
  %v881 = vadd.f32 %v748, %v880
  %882 = vmatprep.mubr.bf16.mxu0 0
  %883 = vmatmul.mubr.bf16.gmra.mxu0 %v278
  %v884 = vpop.f32.mrf.mxu0
  %v885 = vadd.f32 %v752, %v884
  %v886 = vpop.f32.mrf.mxu0
  %v887 = vadd.f32 %v754, %v886
  %v888 = vpop.f32.mrf.mxu0
  %v889 = vadd.f32 %v756, %v888
  %v890 = vpop.f32.mrf.mxu0
  %v891 = vadd.f32 %v758, %v890
  %892 = vmatprep.mubr.bf16.mxu0 0
  %893 = vmatmul.mubr.bf16.gmra.mxu0 %v283
  %v894 = vpop.f32.mrf.mxu0
  %v895 = vadd.f32 %v762, %v894
  %v896 = vpop.f32.mrf.mxu0
  %v897 = vadd.f32 %v764, %v896
  %v898 = vpop.f32.mrf.mxu0
  %v899 = vadd.f32 %v766, %v898
  %v900 = vpop.f32.mrf.mxu0
  %v901 = vadd.f32 %v768, %v900
  %902 = vmatprep.mubr.bf16.mxu0 0
  %903 = vmatmul.mubr.bf16.gmra.mxu0 %v288
  %v904 = vpop.f32.mrf.mxu0
  %v905 = vadd.f32 %v772, %v904
  %v906 = vpop.f32.mrf.mxu0
  %v907 = vadd.f32 %v774, %v906
  %v908 = vpop.f32.mrf.mxu0
  %v909 = vadd.f32 %v776, %v908
  %v910 = vpop.f32.mrf.mxu0
  %v911 = vadd.f32 %v778, %v910
  %912 = vmatprep.mubr.bf16.mxu0 0
  %913 = vmatmul.mubr.bf16.gmra.mxu0 %v293
  %v914 = vpop.f32.mrf.mxu0
  %v915 = vadd.f32 %v782, %v914
  %v916 = vpop.f32.mrf.mxu0
  %v917 = vadd.f32 %v784, %v916
  %v918 = vpop.f32.mrf.mxu0
  %v919 = vadd.f32 %v786, %v918
  %v920 = vpop.f32.mrf.mxu0
  %v921 = vadd.f32 %v788, %v920
  %922 = vmatprep.mubr.bf16.mxu0 0
  %923 = vmatmul.mubr.bf16.gmra.mxu0 %v298
  %v924 = vpop.f32.mrf.mxu0
  %v925 = vadd.f32 %v792, %v924
  %v926 = vpop.f32.mrf.mxu0
  %v927 = vadd.f32 %v794, %v926
  %v928 = vpop.f32.mrf.mxu0
  %v929 = vadd.f32 %v796, %v928
  %v930 = vpop.f32.mrf.mxu0
  %v931 = vadd.f32 %v798, %v930
  %932 = vmatprep.mubr.bf16.mxu0 0
  %933 = vmatmul.mubr.bf16.gmra.mxu0 %v303
  %v934 = vpop.f32.mrf.mxu0
  %v935 = vadd.f32 %v802, %v934
  %v936 = vpop.f32.mrf.mxu0
  %v937 = vadd.f32 %v804, %v936
  %v938 = vpop.f32.mrf.mxu0
  %v939 = vadd.f32 %v806, %v938
  %v940 = vpop.f32.mrf.mxu0
  %v941 = vadd.f32 %v808, %v940
  %942 = vdwg.mxu0
  %vm943 = vcmask 556032
  %v944 = vsel %vm943, %v847, 0.0
  %v945 = vadd.f32 %v845, %v944
  %946 = vadd.xlane.f32.xlu0 %v945
  %v947 = vpop.xlane.xlu0 %946
  %v948 = vsel %vm943, %v851, 0.0
  %v949 = vadd.f32 %v849, %v948
  %950 = vadd.xlane.f32.xlu0 %v949
  %v951 = vpop.xlane.xlu0 %950
  %v952 = vsel %vm943, %v857, 0.0
  %v953 = vadd.f32 %v855, %v952
  %954 = vadd.xlane.f32.xlu0 %v953
  %v955 = vpop.xlane.xlu0 %954
  %v956 = vsel %vm943, %v861, 0.0
  %v957 = vadd.f32 %v859, %v956
  %958 = vadd.xlane.f32.xlu0 %v957
  %v959 = vpop.xlane.xlu0 %958
  %v960 = vsel %vm943, %v867, 0.0
  %v961 = vadd.f32 %v865, %v960
  %962 = vadd.xlane.f32.xlu0 %v961
  %v963 = vpop.xlane.xlu0 %962
  %v964 = vsel %vm943, %v871, 0.0
  %v965 = vadd.f32 %v869, %v964
  %966 = vadd.xlane.f32.xlu0 %v965
  %v967 = vpop.xlane.xlu0 %966
  %v968 = vsel %vm943, %v877, 0.0
  %v969 = vadd.f32 %v875, %v968
  %970 = vadd.xlane.f32.xlu0 %v969
  %v971 = vpop.xlane.xlu0 %970
  %v972 = vsel %vm943, %v881, 0.0
  %v973 = vadd.f32 %v879, %v972
  %974 = vadd.xlane.f32.xlu0 %v973
  %v975 = vpop.xlane.xlu0 %974
  %v976 = vsel %vm943, %v887, 0.0
  %v977 = vadd.f32 %v885, %v976
  %978 = vadd.xlane.f32.xlu0 %v977
  %v979 = vpop.xlane.xlu0 %978
  %v980 = vsel %vm943, %v891, 0.0
  %v981 = vadd.f32 %v889, %v980
  %982 = vadd.xlane.f32.xlu0 %v981
  %v983 = vpop.xlane.xlu0 %982
  %v984 = vsel %vm943, %v897, 0.0
  %v985 = vadd.f32 %v895, %v984
  %986 = vadd.xlane.f32.xlu0 %v985
  %v987 = vpop.xlane.xlu0 %986
  %v988 = vsel %vm943, %v901, 0.0
  %v989 = vadd.f32 %v899, %v988
  %990 = vadd.xlane.f32.xlu0 %v989
  %v991 = vpop.xlane.xlu0 %990
  %v992 = vsel %vm943, %v907, 0.0
  %v993 = vadd.f32 %v905, %v992
  %994 = vadd.xlane.f32.xlu0 %v993
  %v995 = vpop.xlane.xlu0 %994
  %v996 = vsel %vm943, %v911, 0.0
  %v997 = vadd.f32 %v909, %v996
  %998 = vadd.xlane.f32.xlu0 %v997
  %v999 = vpop.xlane.xlu0 %998
  %v1000 = vsel %vm943, %v917, 0.0
  %v1001 = vadd.f32 %v915, %v1000
  %1002 = vadd.xlane.f32.xlu0 %v1001
  %v1003 = vpop.xlane.xlu0 %1002
  %v1004 = vsel %vm943, %v921, 0.0
  %v1005 = vadd.f32 %v919, %v1004
  %1006 = vadd.xlane.f32.xlu0 %v1005
  %v1007 = vpop.xlane.xlu0 %1006
  %v1008 = vsel %vm943, %v927, 0.0
  %v1009 = vadd.f32 %v925, %v1008
  %1010 = vadd.xlane.f32.xlu0 %v1009
  %v1011 = vpop.xlane.xlu0 %1010
  %v1012 = vsel %vm943, %v931, 0.0
  %v1013 = vadd.f32 %v929, %v1012
  %1014 = vadd.xlane.f32.xlu0 %v1013
  %v1015 = vpop.xlane.xlu0 %1014
  %v1016 = vsel %vm943, %v937, 0.0
  %v1017 = vadd.f32 %v935, %v1016
  %1018 = vadd.xlane.f32.xlu0 %v1017
  %v1019 = vpop.xlane.xlu0 %1018
  %v1020 = vsel %vm943, %v941, 0.0
  %v1021 = vadd.f32 %v939, %v1020
  %1022 = vadd.xlane.f32.xlu0 %v1021
  %v1023 = vpop.xlane.xlu0 %1022
  %v1024 = vmul.f32 %v845, %v845
  %v1025 = vmul.f32 %v847, %v847
  %v1026 = vmul.f32 %v849, %v849
  %v1027 = vmul.f32 %v851, %v851
  %v1028 = vmul.f32 %v855, %v855
  %v1029 = vmul.f32 %v857, %v857
  %v1030 = vmul.f32 %v859, %v859
  %v1031 = vmul.f32 %v861, %v861
  %v1032 = vmul.f32 %v865, %v865
  %v1033 = vmul.f32 %v867, %v867
  %v1034 = vmul.f32 %v869, %v869
  %v1035 = vmul.f32 %v871, %v871
  %v1036 = vmul.f32 %v875, %v875
  %v1037 = vmul.f32 %v877, %v877
  %v1038 = vmul.f32 %v879, %v879
  %v1039 = vmul.f32 %v881, %v881
  %v1040 = vmul.f32 %v885, %v885
  %v1041 = vmul.f32 %v887, %v887
  %v1042 = vmul.f32 %v889, %v889
  %v1043 = vmul.f32 %v891, %v891
  %v1044 = vmul.f32 %v895, %v895
  %v1045 = vmul.f32 %v897, %v897
  %v1046 = vmul.f32 %v899, %v899
  %v1047 = vmul.f32 %v901, %v901
  %v1048 = vmul.f32 %v905, %v905
  %v1049 = vmul.f32 %v907, %v907
  %v1050 = vmul.f32 %v909, %v909
  %v1051 = vmul.f32 %v911, %v911
  %v1052 = vmul.f32 %v915, %v915
  %v1053 = vmul.f32 %v917, %v917
  %v1054 = vmul.f32 %v919, %v919
  %v1055 = vmul.f32 %v921, %v921
  %v1056 = vmul.f32 %v925, %v925
  %v1057 = vmul.f32 %v927, %v927
  %v1058 = vmul.f32 %v929, %v929
  %v1059 = vmul.f32 %v931, %v931
  %v1060 = vmul.f32 %v935, %v935
  %v1061 = vmul.f32 %v937, %v937
  %v1062 = vmul.f32 %v939, %v939
  %v1063 = vmul.f32 %v941, %v941
  %v1064 = vsel %vm943, %v1025, 0.0
  %v1065 = vadd.f32 %v1024, %v1064
  %1066 = vadd.xlane.f32.xlu0 %v1065
  %v1067 = vpop.xlane.xlu0 %1066
  %v1068 = vsel %vm943, %v1027, 0.0
  %v1069 = vadd.f32 %v1026, %v1068
  %1070 = vadd.xlane.f32.xlu0 %v1069
  %v1071 = vpop.xlane.xlu0 %1070
  %v1072 = vsel %vm943, %v1029, 0.0
  %v1073 = vadd.f32 %v1028, %v1072
  %1074 = vadd.xlane.f32.xlu0 %v1073
  %v1075 = vpop.xlane.xlu0 %1074
  %v1076 = vsel %vm943, %v1031, 0.0
  %v1077 = vadd.f32 %v1030, %v1076
  %1078 = vadd.xlane.f32.xlu0 %v1077
  %v1079 = vpop.xlane.xlu0 %1078
  %v1080 = vsel %vm943, %v1033, 0.0
  %v1081 = vadd.f32 %v1032, %v1080
  %1082 = vadd.xlane.f32.xlu0 %v1081
  %v1083 = vpop.xlane.xlu0 %1082
  %v1084 = vsel %vm943, %v1035, 0.0
  %v1085 = vadd.f32 %v1034, %v1084
  %1086 = vadd.xlane.f32.xlu0 %v1085
  %v1087 = vpop.xlane.xlu0 %1086
  %v1088 = vsel %vm943, %v1037, 0.0
  %v1089 = vadd.f32 %v1036, %v1088
  %1090 = vadd.xlane.f32.xlu0 %v1089
  %v1091 = vpop.xlane.xlu0 %1090
  %v1092 = vsel %vm943, %v1039, 0.0
  %v1093 = vadd.f32 %v1038, %v1092
  %1094 = vadd.xlane.f32.xlu0 %v1093
  %v1095 = vpop.xlane.xlu0 %1094
  %v1096 = vsel %vm943, %v1041, 0.0
  %v1097 = vadd.f32 %v1040, %v1096
  %1098 = vadd.xlane.f32.xlu0 %v1097
  %v1099 = vpop.xlane.xlu0 %1098
  %v1100 = vsel %vm943, %v1043, 0.0
  %v1101 = vadd.f32 %v1042, %v1100
  %1102 = vadd.xlane.f32.xlu0 %v1101
  %v1103 = vpop.xlane.xlu0 %1102
  %v1104 = vsel %vm943, %v1045, 0.0
  %v1105 = vadd.f32 %v1044, %v1104
  %1106 = vadd.xlane.f32.xlu0 %v1105
  %v1107 = vpop.xlane.xlu0 %1106
  %v1108 = vsel %vm943, %v1047, 0.0
  %v1109 = vadd.f32 %v1046, %v1108
  %1110 = vadd.xlane.f32.xlu0 %v1109
  %v1111 = vpop.xlane.xlu0 %1110
  %v1112 = vsel %vm943, %v1049, 0.0
  %v1113 = vadd.f32 %v1048, %v1112
  %1114 = vadd.xlane.f32.xlu0 %v1113
  %v1115 = vpop.xlane.xlu0 %1114
  %v1116 = vsel %vm943, %v1051, 0.0
  %v1117 = vadd.f32 %v1050, %v1116
  %1118 = vadd.xlane.f32.xlu0 %v1117
  %v1119 = vpop.xlane.xlu0 %1118
  %v1120 = vsel %vm943, %v1053, 0.0
  %v1121 = vadd.f32 %v1052, %v1120
  %1122 = vadd.xlane.f32.xlu0 %v1121
  %v1123 = vpop.xlane.xlu0 %1122
  %v1124 = vsel %vm943, %v1055, 0.0
  %v1125 = vadd.f32 %v1054, %v1124
  %1126 = vadd.xlane.f32.xlu0 %v1125
  %v1127 = vpop.xlane.xlu0 %1126
  %v1128 = vsel %vm943, %v1057, 0.0
  %v1129 = vadd.f32 %v1056, %v1128
  %1130 = vadd.xlane.f32.xlu0 %v1129
  %v1131 = vpop.xlane.xlu0 %1130
  %v1132 = vsel %vm943, %v1059, 0.0
  %v1133 = vadd.f32 %v1058, %v1132
  %1134 = vadd.xlane.f32.xlu0 %v1133
  %v1135 = vpop.xlane.xlu0 %1134
  %v1136 = vsel %vm943, %v1061, 0.0
  %v1137 = vadd.f32 %v1060, %v1136
  %1138 = vadd.xlane.f32.xlu0 %v1137
  %v1139 = vpop.xlane.xlu0 %1138
  %v1140 = vsel %vm943, %v1063, 0.0
  %v1141 = vadd.f32 %v1062, %v1140
  %1142 = vadd.xlane.f32.xlu0 %v1141
  %v1143 = vpop.xlane.xlu0 %1142
  %v1144 = vmul.f32 %v947, 0.0051020407
  %v1145 = vmul.f32 %v951, 0.0051020407
  %v1146 = vmul.f32 %v955, 0.0051020407
  %v1147 = vmul.f32 %v959, 0.0051020407
  %v1148 = vmul.f32 %v963, 0.0051020407
  %v1149 = vmul.f32 %v967, 0.0051020407
  %v1150 = vmul.f32 %v971, 0.0051020407
  %v1151 = vmul.f32 %v975, 0.0051020407
  %v1152 = vmul.f32 %v979, 0.0051020407
  %v1153 = vmul.f32 %v983, 0.0051020407
  %v1154 = vmul.f32 %v987, 0.0051020407
  %v1155 = vmul.f32 %v991, 0.0051020407
  %v1156 = vmul.f32 %v995, 0.0051020407
  %v1157 = vmul.f32 %v999, 0.0051020407
  %v1158 = vmul.f32 %v1003, 0.0051020407
  %v1159 = vmul.f32 %v1007, 0.0051020407
  %v1160 = vmul.f32 %v1011, 0.0051020407
  %v1161 = vmul.f32 %v1015, 0.0051020407
  %v1162 = vmul.f32 %v1019, 0.0051020407
  %v1163 = vmul.f32 %v1023, 0.0051020407
  %v1164 = vmul.f32 %v1067, 0.0051020407
  %v1165 = vmul.f32 %v1071, 0.0051020407
  %v1166 = vmul.f32 %v1075, 0.0051020407
  %v1167 = vmul.f32 %v1079, 0.0051020407
  %v1168 = vmul.f32 %v1083, 0.0051020407
  %v1169 = vmul.f32 %v1087, 0.0051020407
  %v1170 = vmul.f32 %v1091, 0.0051020407
  %v1171 = vmul.f32 %v1095, 0.0051020407
  %v1172 = vmul.f32 %v1099, 0.0051020407
  %v1173 = vmul.f32 %v1103, 0.0051020407
  %v1174 = vmul.f32 %v1107, 0.0051020407
  %v1175 = vmul.f32 %v1111, 0.0051020407
  %v1176 = vmul.f32 %v1115, 0.0051020407
  %v1177 = vmul.f32 %v1119, 0.0051020407
  %v1178 = vmul.f32 %v1123, 0.0051020407
  %v1179 = vmul.f32 %v1127, 0.0051020407
  %v1180 = vmul.f32 %v1131, 0.0051020407
  %v1181 = vmul.f32 %v1135, 0.0051020407
  %v1182 = vmul.f32 %v1139, 0.0051020407
  %v1183 = vmul.f32 %v1143, 0.0051020407
  %v1184 = vmul.f32 %v1144, %v1144
  %v1185 = vmul.f32 %v1145, %v1145
  %v1186 = vmul.f32 %v1146, %v1146
  %v1187 = vmul.f32 %v1147, %v1147
  %v1188 = vmul.f32 %v1148, %v1148
  %v1189 = vmul.f32 %v1149, %v1149
  %v1190 = vmul.f32 %v1150, %v1150
  %v1191 = vmul.f32 %v1151, %v1151
  %v1192 = vmul.f32 %v1152, %v1152
  %v1193 = vmul.f32 %v1153, %v1153
  %v1194 = vmul.f32 %v1154, %v1154
  %v1195 = vmul.f32 %v1155, %v1155
  %v1196 = vmul.f32 %v1156, %v1156
  %v1197 = vmul.f32 %v1157, %v1157
  %v1198 = vmul.f32 %v1158, %v1158
  %v1199 = vmul.f32 %v1159, %v1159
  %v1200 = vmul.f32 %v1160, %v1160
  %v1201 = vmul.f32 %v1161, %v1161
  %v1202 = vmul.f32 %v1162, %v1162
  %v1203 = vmul.f32 %v1163, %v1163
  %v1204 = vsub.f32 %v1164, %v1184
  %v1205 = vsub.f32 %v1165, %v1185
  %v1206 = vsub.f32 %v1166, %v1186
  %v1207 = vsub.f32 %v1167, %v1187
  %v1208 = vsub.f32 %v1168, %v1188
  %v1209 = vsub.f32 %v1169, %v1189
  %v1210 = vsub.f32 %v1170, %v1190
  %v1211 = vsub.f32 %v1171, %v1191
  %v1212 = vsub.f32 %v1172, %v1192
  %v1213 = vsub.f32 %v1173, %v1193
  %v1214 = vsub.f32 %v1174, %v1194
  %v1215 = vsub.f32 %v1175, %v1195
  %v1216 = vsub.f32 %v1176, %v1196
  %v1217 = vsub.f32 %v1177, %v1197
  %v1218 = vsub.f32 %v1178, %v1198
  %v1219 = vsub.f32 %v1179, %v1199
  %v1220 = vsub.f32 %v1180, %v1200
  %v1221 = vsub.f32 %v1181, %v1201
  %v1222 = vsub.f32 %v1182, %v1202
  %v1223 = vsub.f32 %v1183, %v1203
  %v1224 = vadd.f32 %v1204, 0.001
  %v1225 = vadd.f32 %v1205, 0.001
  %v1226 = vadd.f32 %v1206, 0.001
  %v1227 = vadd.f32 %v1207, 0.001
  %v1228 = vadd.f32 %v1208, 0.001
  %v1229 = vadd.f32 %v1209, 0.001
  %v1230 = vadd.f32 %v1210, 0.001
  %v1231 = vadd.f32 %v1211, 0.001
  %v1232 = vadd.f32 %v1212, 0.001
  %v1233 = vadd.f32 %v1213, 0.001
  %v1234 = vadd.f32 %v1214, 0.001
  %v1235 = vadd.f32 %v1215, 0.001
  %v1236 = vadd.f32 %v1216, 0.001
  %v1237 = vadd.f32 %v1217, 0.001
  %v1238 = vadd.f32 %v1218, 0.001
  %v1239 = vadd.f32 %v1219, 0.001
  %v1240 = vadd.f32 %v1220, 0.001
  %v1241 = vadd.f32 %v1221, 0.001
  %v1242 = vadd.f32 %v1222, 0.001
  %v1243 = vadd.f32 %v1223, 0.001
  %v1244 = vrsqrt.pop %v1224
  %v1245 = vrsqrt.pop %v1225
  %v1246 = vrsqrt.pop %v1226
  %v1247 = vrsqrt.pop %v1227
  %v1248 = vrsqrt.pop %v1228
  %v1249 = vrsqrt.pop %v1229
  %v1250 = vrsqrt.pop %v1230
  %v1251 = vrsqrt.pop %v1231
  %v1252 = vrsqrt.pop %v1232
  %v1253 = vrsqrt.pop %v1233
  %v1254 = vrsqrt.pop %v1234
  %v1255 = vrsqrt.pop %v1235
  %v1256 = vrsqrt.pop %v1236
  %v1257 = vrsqrt.pop %v1237
  %v1258 = vrsqrt.pop %v1238
  %v1259 = vrsqrt.pop %v1239
  %v1260 = vrsqrt.pop %v1240
  %v1261 = vrsqrt.pop %v1241
  %v1262 = vrsqrt.pop %v1242
  %v1263 = vrsqrt.pop %v1243
  %v1264 = vld [vmem:[%s3] sm:$0xff]
  %v1265 = vld [vmem:[%s3 + $0x8] sm:$0xff]
  %v1266 = vld [vmem:[%s3 + $0x10] sm:$0xff]
  %v1267 = vld [vmem:[%s3 + $0x18] sm:$0xff]
  %v1268 = vld [vmem:[%s3 + $0x20] sm:$0xff]
  %v1269 = vld [vmem:[%s3 + $0x28] sm:$0xff]
  %v1270 = vld [vmem:[%s3 + $0x30] sm:$0xff]
  %v1271 = vld [vmem:[%s3 + $0x38] sm:$0xff]
  %v1272 = vld [vmem:[%s3 + $0x40] sm:$0xff]
  %v1273 = vld [vmem:[%s3 + $0x48] sm:$0xff]
  %v1274 = vld [vmem:[%s3 + $0x50] sm:$0xff]
  %v1275 = vld [vmem:[%s3 + $0x58] sm:$0xff]
  %v1276 = vld [vmem:[%s3 + $0x60] sm:$0xff]
  %v1277 = vld [vmem:[%s3 + $0x68] sm:$0xff]
  %v1278 = vld [vmem:[%s3 + $0x70] sm:$0xff]
  %v1279 = vld [vmem:[%s3 + $0x78] sm:$0xff]
  %v1280 = vld [vmem:[%s3 + $0x80] sm:$0xff]
  %v1281 = vld [vmem:[%s3 + $0x88] sm:$0xff]
  %v1282 = vld [vmem:[%s3 + $0x90] sm:$0xff]
  %v1283 = vld [vmem:[%s3 + $0x98] sm:$0xff]
  %v1284 = vmul.f32 %v1244, %v1264
  %v1285 = vmul.f32 %v1245, %v1265
  %v1286 = vmul.f32 %v1246, %v1266
  %v1287 = vmul.f32 %v1247, %v1267
  %v1288 = vmul.f32 %v1248, %v1268
  %v1289 = vmul.f32 %v1249, %v1269
  %v1290 = vmul.f32 %v1250, %v1270
  %v1291 = vmul.f32 %v1251, %v1271
  %v1292 = vmul.f32 %v1252, %v1272
  %v1293 = vmul.f32 %v1253, %v1273
  %v1294 = vmul.f32 %v1254, %v1274
  %v1295 = vmul.f32 %v1255, %v1275
  %v1296 = vmul.f32 %v1256, %v1276
  %v1297 = vmul.f32 %v1257, %v1277
  %v1298 = vmul.f32 %v1258, %v1278
  %v1299 = vmul.f32 %v1259, %v1279
  %v1300 = vmul.f32 %v1260, %v1280
  %v1301 = vmul.f32 %v1261, %v1281
  %v1302 = vmul.f32 %v1262, %v1282
  %v1303 = vmul.f32 %v1263, %v1283
  %v1304 = vld [vmem:[%s4] sm:$0xff]
  %v1305 = vld [vmem:[%s4 + $0x8] sm:$0xff]
  %v1306 = vld [vmem:[%s4 + $0x10] sm:$0xff]
  %v1307 = vld [vmem:[%s4 + $0x18] sm:$0xff]
  %v1308 = vld [vmem:[%s4 + $0x20] sm:$0xff]
  %v1309 = vld [vmem:[%s4 + $0x28] sm:$0xff]
  %v1310 = vld [vmem:[%s4 + $0x30] sm:$0xff]
  %v1311 = vld [vmem:[%s4 + $0x38] sm:$0xff]
  %v1312 = vld [vmem:[%s4 + $0x40] sm:$0xff]
  %v1313 = vld [vmem:[%s4 + $0x48] sm:$0xff]
  %v1314 = vld [vmem:[%s4 + $0x50] sm:$0xff]
  %v1315 = vld [vmem:[%s4 + $0x58] sm:$0xff]
  %v1316 = vld [vmem:[%s4 + $0x60] sm:$0xff]
  %v1317 = vld [vmem:[%s4 + $0x68] sm:$0xff]
  %v1318 = vld [vmem:[%s4 + $0x70] sm:$0xff]
  %v1319 = vld [vmem:[%s4 + $0x78] sm:$0xff]
  %v1320 = vld [vmem:[%s4 + $0x80] sm:$0xff]
  %v1321 = vld [vmem:[%s4 + $0x88] sm:$0xff]
  %v1322 = vld [vmem:[%s4 + $0x90] sm:$0xff]
  %v1323 = vld [vmem:[%s4 + $0x98] sm:$0xff]
  %v1324 = vmul.f32 %v1144, %v1284
  %v1325 = vmul.f32 %v1145, %v1285
  %v1326 = vmul.f32 %v1146, %v1286
  %v1327 = vmul.f32 %v1147, %v1287
  %v1328 = vmul.f32 %v1148, %v1288
  %v1329 = vmul.f32 %v1149, %v1289
  %v1330 = vmul.f32 %v1150, %v1290
  %v1331 = vmul.f32 %v1151, %v1291
  %v1332 = vmul.f32 %v1152, %v1292
  %v1333 = vmul.f32 %v1153, %v1293
  %v1334 = vmul.f32 %v1154, %v1294
  %v1335 = vmul.f32 %v1155, %v1295
  %v1336 = vmul.f32 %v1156, %v1296
  %v1337 = vmul.f32 %v1157, %v1297
  %v1338 = vmul.f32 %v1158, %v1298
  %v1339 = vmul.f32 %v1159, %v1299
  %v1340 = vmul.f32 %v1160, %v1300
  %v1341 = vmul.f32 %v1161, %v1301
  %v1342 = vmul.f32 %v1162, %v1302
  %v1343 = vmul.f32 %v1163, %v1303
  %v1344 = vsub.f32 %v1304, %v1324
  %v1345 = vsub.f32 %v1305, %v1325
  %v1346 = vsub.f32 %v1306, %v1326
  %v1347 = vsub.f32 %v1307, %v1327
  %v1348 = vsub.f32 %v1308, %v1328
  %v1349 = vsub.f32 %v1309, %v1329
  %v1350 = vsub.f32 %v1310, %v1330
  %v1351 = vsub.f32 %v1311, %v1331
  %v1352 = vsub.f32 %v1312, %v1332
  %v1353 = vsub.f32 %v1313, %v1333
  %v1354 = vsub.f32 %v1314, %v1334
  %v1355 = vsub.f32 %v1315, %v1335
  %v1356 = vsub.f32 %v1316, %v1336
  %v1357 = vsub.f32 %v1317, %v1337
  %v1358 = vsub.f32 %v1318, %v1338
  %v1359 = vsub.f32 %v1319, %v1339
  %v1360 = vsub.f32 %v1320, %v1340
  %v1361 = vsub.f32 %v1321, %v1341
  %v1362 = vsub.f32 %v1322, %v1342
  %v1363 = vsub.f32 %v1323, %v1343
  %1365 = vset.pattern.permute.xlu0 0
  %1366 = vperm.xlu0 %1365, %v1284
  %v1367 = vpop.permute.xlu0 %1366
  %1370 = vset.pattern.permute.xlu0 0
  %1371 = vperm.xlu0 %1370, %v1285
  %v1372 = vpop.permute.xlu0 %1371
  %1375 = vset.pattern.permute.xlu0 0
  %1376 = vperm.xlu0 %1375, %v1286
  %v1377 = vpop.permute.xlu0 %1376
  %1380 = vset.pattern.permute.xlu0 0
  %1381 = vperm.xlu0 %1380, %v1287
  %v1382 = vpop.permute.xlu0 %1381
  %1385 = vset.pattern.permute.xlu0 0
  %1386 = vperm.xlu0 %1385, %v1288
  %v1387 = vpop.permute.xlu0 %1386
  %1390 = vset.pattern.permute.xlu0 0
  %1391 = vperm.xlu0 %1390, %v1289
  %v1392 = vpop.permute.xlu0 %1391
  %1395 = vset.pattern.permute.xlu0 0
  %1396 = vperm.xlu0 %1395, %v1290
  %v1397 = vpop.permute.xlu0 %1396
  %1400 = vset.pattern.permute.xlu0 0
  %1401 = vperm.xlu0 %1400, %v1291
  %v1402 = vpop.permute.xlu0 %1401
  %1405 = vset.pattern.permute.xlu0 0
  %1406 = vperm.xlu0 %1405, %v1292
  %v1407 = vpop.permute.xlu0 %1406
  %1410 = vset.pattern.permute.xlu0 0
  %1411 = vperm.xlu0 %1410, %v1293
  %v1412 = vpop.permute.xlu0 %1411
  %1415 = vset.pattern.permute.xlu0 0
  %1416 = vperm.xlu0 %1415, %v1294
  %v1417 = vpop.permute.xlu0 %1416
  %1420 = vset.pattern.permute.xlu0 0
  %1421 = vperm.xlu0 %1420, %v1295
  %v1422 = vpop.permute.xlu0 %1421
  %1425 = vset.pattern.permute.xlu0 0
  %1426 = vperm.xlu0 %1425, %v1296
  %v1427 = vpop.permute.xlu0 %1426
  %1430 = vset.pattern.permute.xlu0 0
  %1431 = vperm.xlu0 %1430, %v1297
  %v1432 = vpop.permute.xlu0 %1431
  %1435 = vset.pattern.permute.xlu0 0
  %1436 = vperm.xlu0 %1435, %v1298
  %v1437 = vpop.permute.xlu0 %1436
  %1440 = vset.pattern.permute.xlu0 0
  %1441 = vperm.xlu0 %1440, %v1299
  %v1442 = vpop.permute.xlu0 %1441
  %1445 = vset.pattern.permute.xlu0 0
  %1446 = vperm.xlu0 %1445, %v1300
  %v1447 = vpop.permute.xlu0 %1446
  %1450 = vset.pattern.permute.xlu0 0
  %1451 = vperm.xlu0 %1450, %v1301
  %v1452 = vpop.permute.xlu0 %1451
  %1455 = vset.pattern.permute.xlu0 0
  %1456 = vperm.xlu0 %1455, %v1302
  %v1457 = vpop.permute.xlu0 %1456
  %1460 = vset.pattern.permute.xlu0 0
  %1461 = vperm.xlu0 %1460, %v1303
  %v1462 = vpop.permute.xlu0 %1461
  %v1464 = vmul.f32 %v845, %v1367
  %v1465 = vmul.f32 %v847, %v1367
  %v1466 = vmul.f32 %v849, %v1372
  %v1467 = vmul.f32 %v851, %v1372
  %v1468 = vmul.f32 %v855, %v1377
  %v1469 = vmul.f32 %v857, %v1377
  %v1470 = vmul.f32 %v859, %v1382
  %v1471 = vmul.f32 %v861, %v1382
  %v1472 = vmul.f32 %v865, %v1387
  %v1473 = vmul.f32 %v867, %v1387
  %v1474 = vmul.f32 %v869, %v1392
  %v1475 = vmul.f32 %v871, %v1392
  %v1476 = vmul.f32 %v875, %v1397
  %v1477 = vmul.f32 %v877, %v1397
  %v1478 = vmul.f32 %v879, %v1402
  %v1479 = vmul.f32 %v881, %v1402
  %v1480 = vmul.f32 %v885, %v1407
  %v1481 = vmul.f32 %v887, %v1407
  %v1482 = vmul.f32 %v889, %v1412
  %v1483 = vmul.f32 %v891, %v1412
  %v1484 = vmul.f32 %v895, %v1417
  %v1485 = vmul.f32 %v897, %v1417
  %v1486 = vmul.f32 %v899, %v1422
  %v1487 = vmul.f32 %v901, %v1422
  %v1488 = vmul.f32 %v905, %v1427
  %v1489 = vmul.f32 %v907, %v1427
  %v1490 = vmul.f32 %v909, %v1432
  %v1491 = vmul.f32 %v911, %v1432
  %v1492 = vmul.f32 %v915, %v1437
  %v1493 = vmul.f32 %v917, %v1437
  %v1494 = vmul.f32 %v919, %v1442
  %v1495 = vmul.f32 %v921, %v1442
  %v1496 = vmul.f32 %v925, %v1447
  %v1497 = vmul.f32 %v927, %v1447
  %v1498 = vmul.f32 %v929, %v1452
  %v1499 = vmul.f32 %v931, %v1452
  %v1500 = vmul.f32 %v935, %v1457
  %v1501 = vmul.f32 %v937, %v1457
  %v1502 = vmul.f32 %v939, %v1462
  %v1503 = vmul.f32 %v941, %v1462
  %1505 = vset.pattern.permute.xlu0 0
  %1506 = vperm.xlu0 %1505, %v1344
  %v1507 = vpop.permute.xlu0 %1506
  %1510 = vset.pattern.permute.xlu0 0
  %1511 = vperm.xlu0 %1510, %v1345
  %v1512 = vpop.permute.xlu0 %1511
  %1515 = vset.pattern.permute.xlu0 0
  %1516 = vperm.xlu0 %1515, %v1346
  %v1517 = vpop.permute.xlu0 %1516
  %1520 = vset.pattern.permute.xlu0 0
  %1521 = vperm.xlu0 %1520, %v1347
  %v1522 = vpop.permute.xlu0 %1521
  %1525 = vset.pattern.permute.xlu0 0
  %1526 = vperm.xlu0 %1525, %v1348
  %v1527 = vpop.permute.xlu0 %1526
  %1530 = vset.pattern.permute.xlu0 0
  %1531 = vperm.xlu0 %1530, %v1349
  %v1532 = vpop.permute.xlu0 %1531
  %1535 = vset.pattern.permute.xlu0 0
  %1536 = vperm.xlu0 %1535, %v1350
  %v1537 = vpop.permute.xlu0 %1536
  %1540 = vset.pattern.permute.xlu0 0
  %1541 = vperm.xlu0 %1540, %v1351
  %v1542 = vpop.permute.xlu0 %1541
  %1545 = vset.pattern.permute.xlu0 0
  %1546 = vperm.xlu0 %1545, %v1352
  %v1547 = vpop.permute.xlu0 %1546
  %1550 = vset.pattern.permute.xlu0 0
  %1551 = vperm.xlu0 %1550, %v1353
  %v1552 = vpop.permute.xlu0 %1551
  %1555 = vset.pattern.permute.xlu0 0
  %1556 = vperm.xlu0 %1555, %v1354
  %v1557 = vpop.permute.xlu0 %1556
  %1560 = vset.pattern.permute.xlu0 0
  %1561 = vperm.xlu0 %1560, %v1355
  %v1562 = vpop.permute.xlu0 %1561
  %1565 = vset.pattern.permute.xlu0 0
  %1566 = vperm.xlu0 %1565, %v1356
  %v1567 = vpop.permute.xlu0 %1566
  %1570 = vset.pattern.permute.xlu0 0
  %1571 = vperm.xlu0 %1570, %v1357
  %v1572 = vpop.permute.xlu0 %1571
  %1575 = vset.pattern.permute.xlu0 0
  %1576 = vperm.xlu0 %1575, %v1358
  %v1577 = vpop.permute.xlu0 %1576
  %1580 = vset.pattern.permute.xlu0 0
  %1581 = vperm.xlu0 %1580, %v1359
  %v1582 = vpop.permute.xlu0 %1581
  %1585 = vset.pattern.permute.xlu0 0
  %1586 = vperm.xlu0 %1585, %v1360
  %v1587 = vpop.permute.xlu0 %1586
  %1590 = vset.pattern.permute.xlu0 0
  %1591 = vperm.xlu0 %1590, %v1361
  %v1592 = vpop.permute.xlu0 %1591
  %1595 = vset.pattern.permute.xlu0 0
  %1596 = vperm.xlu0 %1595, %v1362
  %v1597 = vpop.permute.xlu0 %1596
  %1600 = vset.pattern.permute.xlu0 0
  %1601 = vperm.xlu0 %1600, %v1363
  %v1602 = vpop.permute.xlu0 %1601
  %v1604 = vadd.f32 %v1464, %v1507
  %v1605 = vadd.f32 %v1465, %v1507
  %v1606 = vadd.f32 %v1466, %v1512
  %v1607 = vadd.f32 %v1467, %v1512
  %v1608 = vadd.f32 %v1468, %v1517
  %v1609 = vadd.f32 %v1469, %v1517
  %v1610 = vadd.f32 %v1470, %v1522
  %v1611 = vadd.f32 %v1471, %v1522
  %v1612 = vadd.f32 %v1472, %v1527
  %v1613 = vadd.f32 %v1473, %v1527
  %v1614 = vadd.f32 %v1474, %v1532
  %v1615 = vadd.f32 %v1475, %v1532
  %v1616 = vadd.f32 %v1476, %v1537
  %v1617 = vadd.f32 %v1477, %v1537
  %v1618 = vadd.f32 %v1478, %v1542
  %v1619 = vadd.f32 %v1479, %v1542
  %v1620 = vadd.f32 %v1480, %v1547
  %v1621 = vadd.f32 %v1481, %v1547
  %v1622 = vadd.f32 %v1482, %v1552
  %v1623 = vadd.f32 %v1483, %v1552
  %v1624 = vadd.f32 %v1484, %v1557
  %v1625 = vadd.f32 %v1485, %v1557
  %v1626 = vadd.f32 %v1486, %v1562
  %v1627 = vadd.f32 %v1487, %v1562
  %v1628 = vadd.f32 %v1488, %v1567
  %v1629 = vadd.f32 %v1489, %v1567
  %v1630 = vadd.f32 %v1490, %v1572
  %v1631 = vadd.f32 %v1491, %v1572
  %v1632 = vadd.f32 %v1492, %v1577
  %v1633 = vadd.f32 %v1493, %v1577
  %v1634 = vadd.f32 %v1494, %v1582
  %v1635 = vadd.f32 %v1495, %v1582
  %v1636 = vadd.f32 %v1496, %v1587
  %v1637 = vadd.f32 %v1497, %v1587
  %v1638 = vadd.f32 %v1498, %v1592
  %v1639 = vadd.f32 %v1499, %v1592
  %v1640 = vadd.f32 %v1500, %v1597
  %v1641 = vadd.f32 %v1501, %v1597
  %v1642 = vadd.f32 %v1502, %v1602
  %v1643 = vadd.f32 %v1503, %v1602
  %1644 = vst [vmem:[%s5] sm:$0xff] %v1604
  %1645 = vst.msk [vmem:[%s5 + $0x8] sm:$0xff] %vm943, %v1605
  %1646 = vst [vmem:[%s5 + $0x10] sm:$0xff] %v1606
  %1647 = vst.msk [vmem:[%s5 + $0x18] sm:$0xff] %vm943, %v1607
  %1648 = vst [vmem:[%s5 + $0x20] sm:$0xff] %v1608
  %1649 = vst.msk [vmem:[%s5 + $0x28] sm:$0xff] %vm943, %v1609
  %1650 = vst [vmem:[%s5 + $0x30] sm:$0xff] %v1610
  %1651 = vst.msk [vmem:[%s5 + $0x38] sm:$0xff] %vm943, %v1611
  %1652 = vst [vmem:[%s5 + $0x40] sm:$0xff] %v1612
  %1653 = vst.msk [vmem:[%s5 + $0x48] sm:$0xff] %vm943, %v1613
  %1654 = vst [vmem:[%s5 + $0x50] sm:$0xff] %v1614
  %1655 = vst.msk [vmem:[%s5 + $0x58] sm:$0xff] %vm943, %v1615
  %1656 = vst [vmem:[%s5 + $0x60] sm:$0xff] %v1616
  %1657 = vst.msk [vmem:[%s5 + $0x68] sm:$0xff] %vm943, %v1617
  %1658 = vst [vmem:[%s5 + $0x70] sm:$0xff] %v1618
  %1659 = vst.msk [vmem:[%s5 + $0x78] sm:$0xff] %vm943, %v1619
  %1660 = vst [vmem:[%s5 + $0x80] sm:$0xff] %v1620
  %1661 = vst.msk [vmem:[%s5 + $0x88] sm:$0xff] %vm943, %v1621
  %1662 = vst [vmem:[%s5 + $0x90] sm:$0xff] %v1622
  %1663 = vst.msk [vmem:[%s5 + $0x98] sm:$0xff] %vm943, %v1623
  %1664 = vst [vmem:[%s5 + $0xa0] sm:$0xff] %v1624
  %1665 = vst.msk [vmem:[%s5 + $0xa8] sm:$0xff] %vm943, %v1625
  %1666 = vst [vmem:[%s5 + $0xb0] sm:$0xff] %v1626
  %1667 = vst.msk [vmem:[%s5 + $0xb8] sm:$0xff] %vm943, %v1627
  %1668 = vst [vmem:[%s5 + $0xc0] sm:$0xff] %v1628
  %1669 = vst.msk [vmem:[%s5 + $0xc8] sm:$0xff] %vm943, %v1629
  %1670 = vst [vmem:[%s5 + $0xd0] sm:$0xff] %v1630
  %1671 = vst.msk [vmem:[%s5 + $0xd8] sm:$0xff] %vm943, %v1631
  %1672 = vst [vmem:[%s5 + $0xe0] sm:$0xff] %v1632
  %1673 = vst.msk [vmem:[%s5 + $0xe8] sm:$0xff] %vm943, %v1633
  %1674 = vst [vmem:[%s5 + $0xf0] sm:$0xff] %v1634
  %1675 = vst.msk [vmem:[%s5 + $0xf8] sm:$0xff] %vm943, %v1635
  %1676 = vst [vmem:[%s5 + $0x100] sm:$0xff] %v1636
  %1677 = vst.msk [vmem:[%s5 + $0x108] sm:$0xff] %vm943, %v1637
  %1678 = vst [vmem:[%s5 + $0x110] sm:$0xff] %v1638
  %1679 = vst.msk [vmem:[%s5 + $0x118] sm:$0xff] %vm943, %v1639
  %1680 = vst [vmem:[%s5 + $0x120] sm:$0xff] %v1640
  %1681 = vst.msk [vmem:[%s5 + $0x128] sm:$0xff] %vm943, %v1641
  %1682 = vst [vmem:[%s5 + $0x130] sm:$0xff] %v1642
  %1683 = vst.msk [vmem:[%s5 + $0x138] sm:$0xff] %vm943, %v1643
  // Predicated region
  $region22: #{fused_sigmoid_mul_conv_bn.1} parent=0 // pred_check
    _
  $region23: #{fused_sigmoid_mul_conv_bn.1} parent=0 // pred_check_branch
    %1685 = sbr.rel (0) target = $region25
  $region24: #{fused_sigmoid_mul_conv_bn.1} parent=0 // pred_region
    _
  $region25: #{fused_sigmoid_mul_conv_bn.1} parent=0 // pred_fallthru
    _
  // Predicated region
  $region26: #{fused_sigmoid_mul_conv_bn.1} parent=0 // pred_check
    _
  $region27: #{fused_sigmoid_mul_conv_bn.1} parent=0 // pred_check_branch
    %1687 = sbr.rel (0) target = $region29
  $region28: #{fused_sigmoid_mul_conv_bn.1} parent=0 // pred_region
    _
  $region29: #{fused_sigmoid_mul_conv_bn.1} parent=0 // pred_fallthru
    _

</llo_original>
